<compile_context>
chip_gen: v5e
topology: v5e:2x2
jax: 0.10.0
libtpu: 0.0.40
codegen_flags: <defaults>
</compile_context>

<pallas_src>
import functools
import math

import jax
import jax.numpy as jnp
from jax import lax
from jax.experimental import pallas as pl
from jax.experimental.pallas import tpu as pltpu

EPS = 1e-6                      # LayerNormalization eps (tutorial uses 10**-6)
COMPUTE_DTYPE = jnp.bfloat16    # storage / MXU operand dtype (f32 accumulation)


@functools.lru_cache(maxsize=None)
def _vmem_limit_bytes():
    """Generation-aware scoped-VMEM limit (~48 MiB on v7x, ~96 MiB on v5e/v6e)."""
    try:
        cap = int(pltpu.get_tpu_info().vmem_capacity_bytes)
    except Exception:
        cap = 64 * 1024 * 1024
    return int(min(cap * 3 // 4, 100 * 1024 * 1024))


# ---------------------------------------------------------------------------
# In-kernel LayerNorm helper:  alpha * (x - mean) / (std + eps) + bias
# torch.std default is UNBIASED (divide by n-1); reproduced here on purpose.
# (Matches the tutorial's custom LayerNormalization, NOT torch.nn.LayerNorm.)
# All statistics in f32.
# ---------------------------------------------------------------------------
def _layernorm(x, alpha, bias):
    d = x.shape[-1]
    mean = jnp.mean(x, axis=-1, keepdims=True)
    var = jnp.sum((x - mean) ** 2, axis=-1, keepdims=True) / (d - 1)
    return alpha * (x - mean) / (jnp.sqrt(var) + EPS) + bias


# ---------------------------------------------------------------------------
# Fused attention sub-block kernel (one (batch, q-row tile) per grid step):
#   x -> LN -> Q (on q tile) / K|V (on full sequence) -> per-head masked
#   softmax attention -> accumulate straight into the output projection
#   -> + x (residual).
# The 1/sqrt(dk) scale is pre-folded into Wq / bq.
# ---------------------------------------------------------------------------
def _attn_block_kernel(xq_ref, xkv_ref, m_ref, ln_a_ref, ln_b_ref,
                       wq_ref, bq_ref, wkv_ref, bkv_ref, wo_ref, bo_ref,
                       o_ref, *, num_heads):
    cdt = wq_ref.dtype                                   # bf16 matmul dtype
    x_q = xq_ref[0]                                      # (tq, D) query-row tile
    x_kv = xkv_ref[0]                                    # (S,  D) full sequence
    D = x_q.shape[-1]
    H = num_heads
    dk = D // H

    ln_a = ln_a_ref[...]                                 # (1, D) f32 (hoisted)
    ln_b = ln_b_ref[...]

    # Pre-LayerNorm (f32 statistics), then bf16 operands for the MXU.
    hq = _layernorm(x_q.astype(jnp.float32), ln_a, ln_b).astype(cdt)
    hkv = _layernorm(x_kv.astype(jnp.float32), ln_a, ln_b).astype(cdt)

    # Q projection on the query tile only; fused K|V projection on the full
    # sequence (recomputed per q-tile; cheap vs. the attention matmuls).
    q = (jnp.dot(hq, wq_ref[...], preferred_element_type=jnp.float32)
         + bq_ref[...]).astype(cdt)                      # (tq, D), scale folded
    kv = jnp.dot(hkv, wkv_ref[...], preferred_element_type=jnp.float32) + bkv_ref[...]
    k = kv[:, :D].astype(cdt)                            # (S, D)
    v = kv[:, D:].astype(cdt)                            # (S, D)

    # Additive mask bias, computed once (hoisted out of the head loop).
    mask_bias = jnp.where(m_ref[0, 0] == 0.0,
                          jnp.float32(-1e9), jnp.float32(0.0))   # (1, S)

    # Per-head attention, accumulating directly into the output projection:
    #   y += softmax(q_h k_h^T + bias) v_h @ Wo[h*dk:(h+1)*dk, :]
    # No (S, D) ctx buffer, no concatenate; scores are (tq, S) per head.
    y = jnp.zeros((x_q.shape[0], D), jnp.float32)
    for hh in range(H):
        sl = slice(hh * dk, (hh + 1) * dk)
        s = lax.dot_general(q[:, sl], k[:, sl], (((1,), (1,)), ((), ())),
                            preferred_element_type=jnp.float32)  # (tq, S)
        s = s + mask_bias
        s = s - jnp.max(s, axis=-1, keepdims=True)
        p = jnp.exp(s)                                           # f32 softmax
        p = p * pl.reciprocal(jnp.sum(p, axis=-1, keepdims=True), approx=True)
        ctx = jnp.dot(p.astype(cdt), v[:, sl],
                      preferred_element_type=jnp.float32)        # (tq, dk)
        y = y + jnp.dot(ctx.astype(cdt), wo_ref[sl, :],
                        preferred_element_type=jnp.float32)
    y = y + bo_ref[...]

    o_ref[0] = (x_q.astype(jnp.float32) + y).astype(o_ref.dtype)  # residual
    # TODO(synk): dropout is identity here (eval-mode semantics).


def attention_block(x, mask, p):
    B, S, D = x.shape
    H = p["h"]
    tq = min(S, 256)                                  # 256-aligned q-row tile
    n_q = pl.cdiv(S, tq)

    bcast = lambda shape: pl.BlockSpec(shape, lambda b, q: (0, 0))
    in_specs = [
        pl.BlockSpec((1, tq, D), lambda b, q: (b, q, 0)),        # x (query rows)
        pl.BlockSpec((1, S, D), lambda b, q: (b, 0, 0)),         # x (full, K/V path)
        pl.BlockSpec((1, 1, 1, S), lambda b, q: (b, 0, 0, 0)),   # padding mask
        bcast((1, D)), bcast((1, D)),                            # ln1 alpha / bias
        bcast((D, D)), bcast((1, D)),                            # Wq (scaled) / bq
        bcast((D, 2 * D)), bcast((1, 2 * D)),                    # W[k|v] / b[k|v]
        bcast((D, D)), bcast((1, D)),                            # Wo / bo
    ]
    flops = B * (8 * S * D * D + 4 * S * S * D)
    bytes_accessed = (2 * (2 * B * S * D + 4 * D * D)    # bf16 activations + weights
                      + 4 * (B * S + 8 * D))             # f32 mask / biases / LN params
    return pl.pallas_call(
        functools.partial(_attn_block_kernel, num_heads=H),
        out_shape=jax.ShapeDtypeStruct((B, S, D), x.dtype),
        grid=(B, n_q),
        in_specs=in_specs,
        out_specs=pl.BlockSpec((1, tq, D), lambda b, q: (b, q, 0)),
        compiler_params=pltpu.CompilerParams(
            dimension_semantics=("parallel", "parallel"),
            vmem_limit_bytes=_vmem_limit_bytes()),
        cost_estimate=pl.CostEstimate(flops=flops,
                                      transcendentals=B * H * S * S,
                                      bytes_accessed=bytes_accessed),
    )(x, x, mask, p["ln1_a"], p["ln1_b"], p["wq"], p["bq"],
      p["wkv"], p["bkv"], p["wo"], p["bo"])


# ---------------------------------------------------------------------------
# Fused feed-forward sub-block kernel (one (batch, seq-tile) per grid step):
#   x -> LN -> relu(LN(x) @ W1 + b1) @ W2 + b2 -> + x (residual)
# The (tS, d_ff) intermediate stays on-chip.  The variant used for the last
# layer also applies the Encoder's final LayerNormalization post-residual.
# ---------------------------------------------------------------------------
def _ffn_body(x_ref, ln_a_ref, ln_b_ref, w1_ref, b1_ref, w2_ref, b2_ref):
    cdt = w1_ref.dtype
    x = x_ref[0].astype(jnp.float32)                              # (tS, D)
    h = _layernorm(x, ln_a_ref[...], ln_b_ref[...]).astype(cdt)
    t = jnp.dot(h, w1_ref[...], preferred_element_type=jnp.float32) + b1_ref[...]
    t = jnp.maximum(t, 0.0).astype(cdt)                           # ReLU -> bf16
    y = jnp.dot(t, w2_ref[...], preferred_element_type=jnp.float32) + b2_ref[...]
    return x + y                                                  # f32 residual


def _ffn_block_kernel(x_ref, ln_a_ref, ln_b_ref, w1_ref, b1_ref, w2_ref, b2_ref,
                      o_ref):
    o_ref[0] = _ffn_body(x_ref, ln_a_ref, ln_b_ref,
                         w1_ref, b1_ref, w2_ref, b2_ref).astype(o_ref.dtype)
    # TODO(synk): dropout is identity here (eval-mode semantics).


def _ffn_final_kernel(x_ref, ln_a_ref, ln_b_ref, w1_ref, b1_ref, w2_ref, b2_ref,
                      na_ref, nb_ref, o_ref):
    # Last layer: Encoder.norm fused post-residual (saves one B*S*D HBM trip).
    r = _ffn_body(x_ref, ln_a_ref, ln_b_ref, w1_ref, b1_ref, w2_ref, b2_ref)
    o_ref[0] = _layernorm(r, na_ref[...], nb_ref[...]).astype(o_ref.dtype)


def ffn_block(x, p, final_norm_params=None):
    B, S, D = x.shape
    DFF = p["w1"].shape[1]
    tS = min(S, 256)                                   # 256-aligned row tile
    n_s = pl.cdiv(S, tS)

    bcast = lambda shape: pl.BlockSpec(shape, lambda b, s: (0, 0))
    in_specs = [
        pl.BlockSpec((1, tS, D), lambda b, s: (b, s, 0)),          # x
        bcast((1, D)), bcast((1, D)),                              # ln2 alpha / bias
        bcast((D, DFF)), bcast((1, DFF)),                          # W1 / b1
        bcast((DFF, D)), bcast((1, D)),                            # W2 / b2
    ]
    args = [x, p["ln2_a"], p["ln2_b"], p["w1"], p["b1"], p["w2"], p["b2"]]
    if final_norm_params is None:
        kernel, out_dtype = _ffn_block_kernel, x.dtype
    else:
        kernel, out_dtype = _ffn_final_kernel, jnp.float32   # f32 encoder output
        in_specs += [bcast((1, D)), bcast((1, D))]
        args += list(final_norm_params)

    flops = 4 * B * S * D * DFF
    bytes_accessed = (2 * (2 * B * S * D + 2 * D * DFF)   # bf16 activations + W1/W2
                      + 4 * (DFF + 5 * D))                # f32 biases / LN params
    return pl.pallas_call(
        kernel,
        out_shape=jax.ShapeDtypeStruct((B, S, D), out_dtype),
        grid=(B, n_s),
        in_specs=in_specs,
        out_specs=pl.BlockSpec((1, tS, D), lambda b, s: (b, s, 0)),
        compiler_params=pltpu.CompilerParams(
            dimension_semantics=("parallel", "parallel"),
            vmem_limit_bytes=_vmem_limit_bytes()),
        cost_estimate=pl.CostEstimate(flops=flops, transcendentals=0,
                                      bytes_accessed=bytes_accessed),
    )(*args)


# ---------------------------------------------------------------------------
# Standalone final LayerNormalization (only used for the degenerate 0-layer
# Encoder; otherwise it is fused into the last FFN kernel).
# ---------------------------------------------------------------------------
def _final_norm_kernel(x_ref, a_ref, b_ref, o_ref):
    x = x_ref[0].astype(jnp.float32)
    o_ref[0] = _layernorm(x, a_ref[...], b_ref[...]).astype(o_ref.dtype)


def final_norm(x, alpha, bias):
    B, S, D = x.shape
    return pl.pallas_call(
        _final_norm_kernel,
        out_shape=jax.ShapeDtypeStruct((B, S, D), jnp.float32),
        grid=(B,),
        in_specs=[pl.BlockSpec((1, S, D), lambda b: (b, 0, 0)),
                  pl.BlockSpec((1, D), lambda b: (0, 0)),
                  pl.BlockSpec((1, D), lambda b: (0, 0))],
        out_specs=pl.BlockSpec((1, S, D), lambda b: (b, 0, 0)),
        compiler_params=pltpu.CompilerParams(
            dimension_semantics=("parallel",),
            vmem_limit_bytes=_vmem_limit_bytes()),
    )(x, alpha, bias)


# ---------------------------------------------------------------------------
# Encoder.forward: loop over layers (2 fused pallas_calls per layer); the final
# LayerNormalization is fused into the last layer's FFN kernel.
# ---------------------------------------------------------------------------
def encoder(x, mask, fused_params):
    h = x.astype(COMPUTE_DTYPE)               # bf16 activations between layers
    layers = fused_params["layers"]
    if not layers:
        return final_norm(h, fused_params["norm_a"], fused_params["norm_b"])
    last = len(layers) - 1
    for i, lp in enumerate(layers):
        h = attention_block(h, mask, lp)
        fn = ((fused_params["norm_a"], fused_params["norm_b"])
              if i == last else None)
        h = ffn_block(h, lp, final_norm_params=fn)
    return h                                   # f32 (final fused kernel writes f32)


# ---------------------------------------------------------------------------
# Deterministic synthetic parameters (torch-like layout), then a one-time
# fusion/fold step: fold 1/sqrt(dk) into Wq/bq, concatenate Wk|Wv, cast the big
# weight matrices to bf16 (biases / LN params stay f32).
# ---------------------------------------------------------------------------
def init_params(key, d_model, d_ff, h, n_layers):
    def dense(k, din, dout):
        w = jax.random.normal(k, (din, dout), jnp.float32) * 0.02
        b = jnp.zeros((dout,), jnp.float32)
        return w, b

    layers = []
    keys = jax.random.split(key, n_layers)
    for lk in keys:
        ks = jax.random.split(lk, 6)
        wq, bq = dense(ks[0], d_model, d_model)
        wk, bk = dense(ks[1], d_model, d_model)
        wv, bv = dense(ks[2], d_model, d_model)
        wo, bo = dense(ks[3], d_model, d_model)
        w1, b1 = dense(ks[4], d_model, d_ff)
        w2, b2 = dense(ks[5], d_ff, d_model)
        layers.append(dict(
            attn=dict(h=h, wq=wq, bq=bq, wk=wk, bk=bk, wv=wv, bv=bv, wo=wo, bo=bo),
            ln1_a=jnp.ones((d_model,), jnp.float32),
            ln1_b=jnp.zeros((d_model,), jnp.float32),
            ln2_a=jnp.ones((d_model,), jnp.float32),
            ln2_b=jnp.zeros((d_model,), jnp.float32),
            ff_w1=w1, ff_b1=b1, ff_w2=w2, ff_b2=b2,
        ))
    return dict(
        layers=layers,
        norm_a=jnp.ones((d_model,), jnp.float32),
        norm_b=jnp.zeros((d_model,), jnp.float32),
    )


def fuse_params(params, d_model, h):
    scale = 1.0 / math.sqrt(d_model // h)
    wdt = COMPUTE_DTYPE
    layers = []
    for lp in params["layers"]:
        a = lp["attn"]
        layers.append(dict(
            h=h,
            ln1_a=lp["ln1_a"].reshape(1, -1), ln1_b=lp["ln1_b"].reshape(1, -1),
            wq=(a["wq"] * scale).astype(wdt), bq=(a["bq"] * scale).reshape(1, -1),
            wkv=jnp.concatenate([a["wk"], a["wv"]], axis=1).astype(wdt),
            bkv=jnp.concatenate([a["bk"], a["bv"]]).reshape(1, -1),
            wo=a["wo"].astype(wdt), bo=a["bo"].reshape(1, -1),
            ln2_a=lp["ln2_a"].reshape(1, -1), ln2_b=lp["ln2_b"].reshape(1, -1),
            w1=lp["ff_w1"].astype(wdt), b1=lp["ff_b1"].reshape(1, -1),
            w2=lp["ff_w2"].astype(wdt), b2=lp["ff_b2"].reshape(1, -1),
        ))
    return dict(layers=layers,
                norm_a=params["norm_a"].reshape(1, -1),
                norm_b=params["norm_b"].reshape(1, -1))


if __name__ == "__main__":
    B, S, D, H, DFF, NLAYERS = 2, 8, 32, 4, 64, 2

    key = jax.random.PRNGKey(0)
    kx, kp = jax.random.split(key)
    x = jax.random.normal(kx, (B, S, D), dtype=jnp.float32)

    # padding mask: 1 = attend, 0 = masked; batch 1 has its last 2 tokens padded
    mask = jnp.ones((B, 1, 1, S), dtype=jnp.float32)
    mask = mask.at[1, 0, 0, 6:].set(0.0)

    raw_params = init_params(kp, D, DFF, H, NLAYERS)
    params = fuse_params(raw_params, D, H)

    out = jax.block_until_ready(encoder(x, mask, params))
    assert out.shape == (B, S, D) and out.dtype == jnp.float32
    assert bool(jnp.all(jnp.isfinite(out)))
    print("KERNEL_OK")
</pallas_src>

<mosaic_0001>
module attributes {stable_mosaic.version = 11 : i64} {
  func.func @_attn_block_kernel(%arg0: i32, %arg1: i32, %arg2: memref<1x8x32xbf16, #tpu.memory_space<vmem>>, %arg3: memref<1x8x32xbf16, #tpu.memory_space<vmem>>, %arg4: memref<1x1x1x8xf32, #tpu.memory_space<vmem>>, %arg5: memref<1x32xf32, #tpu.memory_space<vmem>>, %arg6: memref<1x32xf32, #tpu.memory_space<vmem>>, %arg7: memref<32x32xbf16, #tpu.memory_space<vmem>>, %arg8: memref<1x32xf32, #tpu.memory_space<vmem>>, %arg9: memref<32x64xbf16, #tpu.memory_space<vmem>>, %arg10: memref<1x64xf32, #tpu.memory_space<vmem>>, %arg11: memref<32x32xbf16, #tpu.memory_space<vmem>>, %arg12: memref<1x32xf32, #tpu.memory_space<vmem>>, %arg13: memref<1x8x32xbf16, #tpu.memory_space<vmem>>) attributes {dimension_semantics = [#tpu.dimension_semantics<parallel>, #tpu.dimension_semantics<parallel>], iteration_bounds = array<i64: 2, 1>, scalar_prefetch = 0 : i64, scratch_operands = 0 : i64, tpu.core_type = #tpu.core_type<tc>, window_params = [{transform_indices = @transform_0, window_bounds = array<i64: 1, 8, 32>}, {transform_indices = @transform_1, window_bounds = array<i64: 1, 8, 32>}, {transform_indices = @transform_2, window_bounds = array<i64: 1, 1, 1, 8>}, {pipeline_mode = #tpu.pipeline_mode<synchronous>, transform_indices = @transform_3, window_bounds = array<i64: 1, 32>}, {pipeline_mode = #tpu.pipeline_mode<synchronous>, transform_indices = @transform_4, window_bounds = array<i64: 1, 32>}, {pipeline_mode = #tpu.pipeline_mode<synchronous>, transform_indices = @transform_5, window_bounds = array<i64: 32, 32>}, {pipeline_mode = #tpu.pipeline_mode<synchronous>, transform_indices = @transform_6, window_bounds = array<i64: 1, 32>}, {pipeline_mode = #tpu.pipeline_mode<synchronous>, transform_indices = @transform_7, window_bounds = array<i64: 32, 64>}, {pipeline_mode = #tpu.pipeline_mode<synchronous>, transform_indices = @transform_8, window_bounds = array<i64: 1, 64>}, {pipeline_mode = #tpu.pipeline_mode<synchronous>, transform_indices = @transform_9, window_bounds = array<i64: 32, 32>}, {pipeline_mode = #tpu.pipeline_mode<synchronous>, transform_indices = @transform_10, window_bounds = array<i64: 1, 32>}, {transform_indices = @transform_11, window_bounds = array<i64: 1, 8, 32>}]} {
    %c0 = arith.constant 0 : index
    %c0_0 = arith.constant 0 : index
    %c0_1 = arith.constant 0 : index
    %0 = vector.load %arg2[%c0, %c0_0, %c0_1] : memref<1x8x32xbf16, #tpu.memory_space<vmem>>, vector<1x8x32xbf16>
    %1 = vector.shape_cast %0 : vector<1x8x32xbf16> to vector<8x32xbf16>
    %c0_2 = arith.constant 0 : index
    %c0_3 = arith.constant 0 : index
    %c0_4 = arith.constant 0 : index
    %2 = vector.load %arg3[%c0_2, %c0_3, %c0_4] : memref<1x8x32xbf16, #tpu.memory_space<vmem>>, vector<1x8x32xbf16>
    %3 = vector.shape_cast %2 : vector<1x8x32xbf16> to vector<8x32xbf16>
    %c0_5 = arith.constant 0 : index
    %c0_6 = arith.constant 0 : index
    %4 = vector.load %arg5[%c0_5, %c0_6] : memref<1x32xf32, #tpu.memory_space<vmem>>, vector<1x32xf32>
    %c0_7 = arith.constant 0 : index
    %c0_8 = arith.constant 0 : index
    %5 = vector.load %arg6[%c0_7, %c0_8] : memref<1x32xf32, #tpu.memory_space<vmem>>, vector<1x32xf32>
    %6 = arith.extf %1 : vector<8x32xbf16> to vector<8x32xf32>
    %cst = arith.constant dense<0.000000e+00> : vector<8xf32>
    %7 = vector.multi_reduction <add>, %6, %cst [1] : vector<8x32xf32> to vector<8xf32>
    %8 = vector.shape_cast %7 : vector<8xf32> to vector<8x1xf32>
    %cst_9 = arith.constant 3.200000e+01 : f32
    %9 = vector.broadcast %cst_9 : f32 to vector<8x1xf32>
    %10 = arith.divf %8, %9 : vector<8x1xf32>
    %11 = vector.broadcast %10 : vector<8x1xf32> to vector<8x32xf32>
    %12 = arith.subf %6, %11 : vector<8x32xf32>
    %13 = arith.mulf %12, %12 : vector<8x32xf32>
    %cst_10 = arith.constant dense<0.000000e+00> : vector<8xf32>
    %14 = vector.multi_reduction <add>, %13, %cst_10 [1] : vector<8x32xf32> to vector<8xf32>
    %15 = vector.shape_cast %14 : vector<8xf32> to vector<8x1xf32>
    %cst_11 = arith.constant 3.100000e+01 : f32
    %16 = vector.broadcast %cst_11 : f32 to vector<8x1xf32>
    %17 = arith.divf %15, %16 : vector<8x1xf32>
    %18 = vector.broadcast %10 : vector<8x1xf32> to vector<8x32xf32>
    %19 = arith.subf %6, %18 : vector<8x32xf32>
    %20 = vector.broadcast %4 : vector<1x32xf32> to vector<8x32xf32>
    %21 = arith.mulf %20, %19 : vector<8x32xf32>
    %22 = math.sqrt %17 : vector<8x1xf32>
    %cst_12 = arith.constant 9.99999997E-7 : f32
    %23 = vector.broadcast %cst_12 : f32 to vector<8x1xf32>
    %24 = arith.addf %22, %23 : vector<8x1xf32>
    %25 = vector.broadcast %24 : vector<8x1xf32> to vector<8x32xf32>
    %26 = arith.divf %21, %25 : vector<8x32xf32>
    %27 = vector.broadcast %5 : vector<1x32xf32> to vector<8x32xf32>
    %28 = arith.addf %26, %27 : vector<8x32xf32>
    %29 = arith.truncf %28 : vector<8x32xf32> to vector<8x32xbf16>
    %30 = arith.extf %3 : vector<8x32xbf16> to vector<8x32xf32>
    %cst_13 = arith.constant dense<0.000000e+00> : vector<8xf32>
    %31 = vector.multi_reduction <add>, %30, %cst_13 [1] : vector<8x32xf32> to vector<8xf32>
    %32 = vector.shape_cast %31 : vector<8xf32> to vector<8x1xf32>
    %cst_14 = arith.constant 3.200000e+01 : f32
    %33 = vector.broadcast %cst_14 : f32 to vector<8x1xf32>
    %34 = arith.divf %32, %33 : vector<8x1xf32>
    %35 = vector.broadcast %34 : vector<8x1xf32> to vector<8x32xf32>
    %36 = arith.subf %30, %35 : vector<8x32xf32>
    %37 = arith.mulf %36, %36 : vector<8x32xf32>
    %cst_15 = arith.constant dense<0.000000e+00> : vector<8xf32>
    %38 = vector.multi_reduction <add>, %37, %cst_15 [1] : vector<8x32xf32> to vector<8xf32>
    %39 = vector.shape_cast %38 : vector<8xf32> to vector<8x1xf32>
    %cst_16 = arith.constant 3.100000e+01 : f32
    %40 = vector.broadcast %cst_16 : f32 to vector<8x1xf32>
    %41 = arith.divf %39, %40 : vector<8x1xf32>
    %42 = vector.broadcast %34 : vector<8x1xf32> to vector<8x32xf32>
    %43 = arith.subf %30, %42 : vector<8x32xf32>
    %44 = vector.broadcast %4 : vector<1x32xf32> to vector<8x32xf32>
    %45 = arith.mulf %44, %43 : vector<8x32xf32>
    %46 = math.sqrt %41 : vector<8x1xf32>
    %cst_17 = arith.constant 9.99999997E-7 : f32
    %47 = vector.broadcast %cst_17 : f32 to vector<8x1xf32>
    %48 = arith.addf %46, %47 : vector<8x1xf32>
    %49 = vector.broadcast %48 : vector<8x1xf32> to vector<8x32xf32>
    %50 = arith.divf %45, %49 : vector<8x32xf32>
    %51 = vector.broadcast %5 : vector<1x32xf32> to vector<8x32xf32>
    %52 = arith.addf %50, %51 : vector<8x32xf32>
    %53 = arith.truncf %52 : vector<8x32xf32> to vector<8x32xbf16>
    %c0_18 = arith.constant 0 : index
    %c0_19 = arith.constant 0 : index
    %54 = vector.load %arg7[%c0_18, %c0_19] : memref<32x32xbf16, #tpu.memory_space<vmem>>, vector<32x32xbf16>
    %cst_20 = arith.constant dense<0.000000e+00> : vector<8x32xf32>
    %55 = tpu.matmul %29, %54, %cst_20 {dimension_numbers = #tpu.dot_dimension_numbers<[1], [0], [0], [1], [0, 0, 1, 1], [], []>} : vector<8x32xbf16>, vector<32x32xbf16>, vector<8x32xf32> -> vector<8x32xf32>
    %c0_21 = arith.constant 0 : index
    %c0_22 = arith.constant 0 : index
    %56 = vector.load %arg8[%c0_21, %c0_22] : memref<1x32xf32, #tpu.memory_space<vmem>>, vector<1x32xf32>
    %57 = vector.broadcast %56 : vector<1x32xf32> to vector<8x32xf32>
    %58 = arith.addf %55, %57 : vector<8x32xf32>
    %59 = arith.truncf %58 : vector<8x32xf32> to vector<8x32xbf16>
    %c0_23 = arith.constant 0 : index
    %c0_24 = arith.constant 0 : index
    %60 = vector.load %arg9[%c0_23, %c0_24] : memref<32x64xbf16, #tpu.memory_space<vmem>>, vector<32x64xbf16>
    %cst_25 = arith.constant dense<0.000000e+00> : vector<8x64xf32>
    %61 = tpu.matmul %53, %60, %cst_25 {dimension_numbers = #tpu.dot_dimension_numbers<[1], [0], [0], [1], [0, 0, 1, 1], [], []>} : vector<8x32xbf16>, vector<32x64xbf16>, vector<8x64xf32> -> vector<8x64xf32>
    %c0_26 = arith.constant 0 : index
    %c0_27 = arith.constant 0 : index
    %62 = vector.load %arg10[%c0_26, %c0_27] : memref<1x64xf32, #tpu.memory_space<vmem>>, vector<1x64xf32>
    %63 = vector.broadcast %62 : vector<1x64xf32> to vector<8x64xf32>
    %64 = arith.addf %61, %63 : vector<8x64xf32>
    %65 = vector.extract_strided_slice %64 {offsets = [0, 0], sizes = [8, 32], strides = [1, 1]} : vector<8x64xf32> to vector<8x32xf32>
    %66 = arith.truncf %65 : vector<8x32xf32> to vector<8x32xbf16>
    %67 = vector.extract_strided_slice %64 {offsets = [0, 32], sizes = [8, 32], strides = [1, 1]} : vector<8x64xf32> to vector<8x32xf32>
    %68 = arith.truncf %67 : vector<8x32xf32> to vector<8x32xbf16>
    %c0_28 = arith.constant 0 : index
    %c0_29 = arith.constant 0 : index
    %c0_30 = arith.constant 0 : index
    %c0_31 = arith.constant 0 : index
    %69 = vector.load %arg4[%c0_28, %c0_29, %c0_30, %c0_31] : memref<1x1x1x8xf32, #tpu.memory_space<vmem>>, vector<1x1x1x8xf32>
    %70 = vector.shape_cast %69 : vector<1x1x1x8xf32> to vector<1x8xf32>
    %cst_32 = arith.constant 0.000000e+00 : f32
    %71 = vector.broadcast %cst_32 : f32 to vector<1x8xf32>
    %72 = arith.cmpf oeq, %70, %71 : vector<1x8xf32>
    %cst_33 = arith.constant -1.000000e+09 : f32
    %cst_34 = arith.constant 0.000000e+00 : f32
    %73 = vector.broadcast %cst_33 : f32 to vector<1x8xf32>
    %74 = vector.broadcast %cst_34 : f32 to vector<1x8xf32>
    %75 = arith.select %72, %73, %74 : vector<1x8xi1>, vector<1x8xf32>
    %cst_35 = arith.constant 0.000000e+00 : f32
    %76 = vector.broadcast %cst_35 : f32 to vector<8x32xf32>
    %77 = vector.extract_strided_slice %59 {offsets = [0, 0], sizes = [8, 8], strides = [1, 1]} : vector<8x32xbf16> to vector<8x8xbf16>
    %78 = vector.extract_strided_slice %66 {offsets = [0, 0], sizes = [8, 8], strides = [1, 1]} : vector<8x32xbf16> to vector<8x8xbf16>
    %cst_36 = arith.constant dense<0.000000e+00> : vector<8x8xf32>
    %79 = tpu.matmul %77, %78, %cst_36 {dimension_numbers = #tpu.dot_dimension_numbers<[1], [1], [0], [0], [0, 0, 1, 0], [], []>} : vector<8x8xbf16>, vector<8x8xbf16>, vector<8x8xf32> -> vector<8x8xf32>
    %80 = vector.broadcast %75 : vector<1x8xf32> to vector<8x8xf32>
    %81 = arith.addf %79, %80 : vector<8x8xf32>
    %cst_37 = arith.constant dense<0xFF800000> : vector<8xf32>
    %82 = vector.multi_reduction <maximumf>, %81, %cst_37 [1] : vector<8x8xf32> to vector<8xf32>
    %83 = vector.shape_cast %82 : vector<8xf32> to vector<8x1xf32>
    %84 = vector.broadcast %83 : vector<8x1xf32> to vector<8x8xf32>
    %85 = arith.subf %81, %84 : vector<8x8xf32>
    %86 = math.exp %85 : vector<8x8xf32>
    %cst_38 = arith.constant dense<0.000000e+00> : vector<8xf32>
    %87 = vector.multi_reduction <add>, %86, %cst_38 [1] : vector<8x8xf32> to vector<8xf32>
    %88 = vector.shape_cast %87 : vector<8xf32> to vector<8x1xf32>
    %89 = tpu.reciprocal %88 {approx = true} : vector<8x1xf32> -> vector<8x1xf32>
    %90 = vector.broadcast %89 : vector<8x1xf32> to vector<8x8xf32>
    %91 = arith.mulf %86, %90 : vector<8x8xf32>
    %92 = arith.truncf %91 : vector<8x8xf32> to vector<8x8xbf16>
    %93 = vector.extract_strided_slice %68 {offsets = [0, 0], sizes = [8, 8], strides = [1, 1]} : vector<8x32xbf16> to vector<8x8xbf16>
    %cst_39 = arith.constant dense<0.000000e+00> : vector<8x8xf32>
    %94 = tpu.matmul %92, %93, %cst_39 {dimension_numbers = #tpu.dot_dimension_numbers<[1], [0], [0], [1], [0, 0, 1, 1], [], []>} : vector<8x8xbf16>, vector<8x8xbf16>, vector<8x8xf32> -> vector<8x8xf32>
    %95 = arith.truncf %94 : vector<8x8xf32> to vector<8x8xbf16>
    %c0_40 = arith.constant 0 : index
    %c0_41 = arith.constant 0 : index
    %96 = vector.load %arg11[%c0_40, %c0_41] : memref<32x32xbf16, #tpu.memory_space<vmem>>, vector<8x32xbf16>
    %cst_42 = arith.constant dense<0.000000e+00> : vector<8x32xf32>
    %97 = tpu.matmul %95, %96, %cst_42 {dimension_numbers = #tpu.dot_dimension_numbers<[1], [0], [0], [1], [0, 0, 1, 1], [], []>} : vector<8x8xbf16>, vector<8x32xbf16>, vector<8x32xf32> -> vector<8x32xf32>
    %98 = arith.addf %76, %97 : vector<8x32xf32>
    %99 = vector.extract_strided_slice %59 {offsets = [0, 8], sizes = [8, 8], strides = [1, 1]} : vector<8x32xbf16> to vector<8x8xbf16>
    %100 = vector.extract_strided_slice %66 {offsets = [0, 8], sizes = [8, 8], strides = [1, 1]} : vector<8x32xbf16> to vector<8x8xbf16>
    %cst_43 = arith.constant dense<0.000000e+00> : vector<8x8xf32>
    %101 = tpu.matmul %99, %100, %cst_43 {dimension_numbers = #tpu.dot_dimension_numbers<[1], [1], [0], [0], [0, 0, 1, 0], [], []>} : vector<8x8xbf16>, vector<8x8xbf16>, vector<8x8xf32> -> vector<8x8xf32>
    %102 = vector.broadcast %75 : vector<1x8xf32> to vector<8x8xf32>
    %103 = arith.addf %101, %102 : vector<8x8xf32>
    %cst_44 = arith.constant dense<0xFF800000> : vector<8xf32>
    %104 = vector.multi_reduction <maximumf>, %103, %cst_44 [1] : vector<8x8xf32> to vector<8xf32>
    %105 = vector.shape_cast %104 : vector<8xf32> to vector<8x1xf32>
    %106 = vector.broadcast %105 : vector<8x1xf32> to vector<8x8xf32>
    %107 = arith.subf %103, %106 : vector<8x8xf32>
    %108 = math.exp %107 : vector<8x8xf32>
    %cst_45 = arith.constant dense<0.000000e+00> : vector<8xf32>
    %109 = vector.multi_reduction <add>, %108, %cst_45 [1] : vector<8x8xf32> to vector<8xf32>
    %110 = vector.shape_cast %109 : vector<8xf32> to vector<8x1xf32>
    %111 = tpu.reciprocal %110 {approx = true} : vector<8x1xf32> -> vector<8x1xf32>
    %112 = vector.broadcast %111 : vector<8x1xf32> to vector<8x8xf32>
    %113 = arith.mulf %108, %112 : vector<8x8xf32>
    %114 = arith.truncf %113 : vector<8x8xf32> to vector<8x8xbf16>
    %115 = vector.extract_strided_slice %68 {offsets = [0, 8], sizes = [8, 8], strides = [1, 1]} : vector<8x32xbf16> to vector<8x8xbf16>
    %cst_46 = arith.constant dense<0.000000e+00> : vector<8x8xf32>
    %116 = tpu.matmul %114, %115, %cst_46 {dimension_numbers = #tpu.dot_dimension_numbers<[1], [0], [0], [1], [0, 0, 1, 1], [], []>} : vector<8x8xbf16>, vector<8x8xbf16>, vector<8x8xf32> -> vector<8x8xf32>
    %117 = arith.truncf %116 : vector<8x8xf32> to vector<8x8xbf16>
    %c8 = arith.constant 8 : index
    %c0_47 = arith.constant 0 : index
    %118 = vector.load %arg11[%c8, %c0_47] : memref<32x32xbf16, #tpu.memory_space<vmem>>, vector<8x32xbf16>
    %cst_48 = arith.constant dense<0.000000e+00> : vector<8x32xf32>
    %119 = tpu.matmul %117, %118, %cst_48 {dimension_numbers = #tpu.dot_dimension_numbers<[1], [0], [0], [1], [0, 0, 1, 1], [], []>} : vector<8x8xbf16>, vector<8x32xbf16>, vector<8x32xf32> -> vector<8x32xf32>
    %120 = arith.addf %98, %119 : vector<8x32xf32>
    %121 = vector.extract_strided_slice %59 {offsets = [0, 16], sizes = [8, 8], strides = [1, 1]} : vector<8x32xbf16> to vector<8x8xbf16>
    %122 = vector.extract_strided_slice %66 {offsets = [0, 16], sizes = [8, 8], strides = [1, 1]} : vector<8x32xbf16> to vector<8x8xbf16>
    %cst_49 = arith.constant dense<0.000000e+00> : vector<8x8xf32>
    %123 = tpu.matmul %121, %122, %cst_49 {dimension_numbers = #tpu.dot_dimension_numbers<[1], [1], [0], [0], [0, 0, 1, 0], [], []>} : vector<8x8xbf16>, vector<8x8xbf16>, vector<8x8xf32> -> vector<8x8xf32>
    %124 = vector.broadcast %75 : vector<1x8xf32> to vector<8x8xf32>
    %125 = arith.addf %123, %124 : vector<8x8xf32>
    %cst_50 = arith.constant dense<0xFF800000> : vector<8xf32>
    %126 = vector.multi_reduction <maximumf>, %125, %cst_50 [1] : vector<8x8xf32> to vector<8xf32>
    %127 = vector.shape_cast %126 : vector<8xf32> to vector<8x1xf32>
    %128 = vector.broadcast %127 : vector<8x1xf32> to vector<8x8xf32>
    %129 = arith.subf %125, %128 : vector<8x8xf32>
    %130 = math.exp %129 : vector<8x8xf32>
    %cst_51 = arith.constant dense<0.000000e+00> : vector<8xf32>
    %131 = vector.multi_reduction <add>, %130, %cst_51 [1] : vector<8x8xf32> to vector<8xf32>
    %132 = vector.shape_cast %131 : vector<8xf32> to vector<8x1xf32>
    %133 = tpu.reciprocal %132 {approx = true} : vector<8x1xf32> -> vector<8x1xf32>
    %134 = vector.broadcast %133 : vector<8x1xf32> to vector<8x8xf32>
    %135 = arith.mulf %130, %134 : vector<8x8xf32>
    %136 = arith.truncf %135 : vector<8x8xf32> to vector<8x8xbf16>
    %137 = vector.extract_strided_slice %68 {offsets = [0, 16], sizes = [8, 8], strides = [1, 1]} : vector<8x32xbf16> to vector<8x8xbf16>
    %cst_52 = arith.constant dense<0.000000e+00> : vector<8x8xf32>
    %138 = tpu.matmul %136, %137, %cst_52 {dimension_numbers = #tpu.dot_dimension_numbers<[1], [0], [0], [1], [0, 0, 1, 1], [], []>} : vector<8x8xbf16>, vector<8x8xbf16>, vector<8x8xf32> -> vector<8x8xf32>
    %139 = arith.truncf %138 : vector<8x8xf32> to vector<8x8xbf16>
    %c16 = arith.constant 16 : index
    %c0_53 = arith.constant 0 : index
    %140 = vector.load %arg11[%c16, %c0_53] : memref<32x32xbf16, #tpu.memory_space<vmem>>, vector<8x32xbf16>
    %cst_54 = arith.constant dense<0.000000e+00> : vector<8x32xf32>
    %141 = tpu.matmul %139, %140, %cst_54 {dimension_numbers = #tpu.dot_dimension_numbers<[1], [0], [0], [1], [0, 0, 1, 1], [], []>} : vector<8x8xbf16>, vector<8x32xbf16>, vector<8x32xf32> -> vector<8x32xf32>
    %142 = arith.addf %120, %141 : vector<8x32xf32>
    %143 = vector.extract_strided_slice %59 {offsets = [0, 24], sizes = [8, 8], strides = [1, 1]} : vector<8x32xbf16> to vector<8x8xbf16>
    %144 = vector.extract_strided_slice %66 {offsets = [0, 24], sizes = [8, 8], strides = [1, 1]} : vector<8x32xbf16> to vector<8x8xbf16>
    %cst_55 = arith.constant dense<0.000000e+00> : vector<8x8xf32>
    %145 = tpu.matmul %143, %144, %cst_55 {dimension_numbers = #tpu.dot_dimension_numbers<[1], [1], [0], [0], [0, 0, 1, 0], [], []>} : vector<8x8xbf16>, vector<8x8xbf16>, vector<8x8xf32> -> vector<8x8xf32>
    %146 = vector.broadcast %75 : vector<1x8xf32> to vector<8x8xf32>
    %147 = arith.addf %145, %146 : vector<8x8xf32>
    %cst_56 = arith.constant dense<0xFF800000> : vector<8xf32>
    %148 = vector.multi_reduction <maximumf>, %147, %cst_56 [1] : vector<8x8xf32> to vector<8xf32>
    %149 = vector.shape_cast %148 : vector<8xf32> to vector<8x1xf32>
    %150 = vector.broadcast %149 : vector<8x1xf32> to vector<8x8xf32>
    %151 = arith.subf %147, %150 : vector<8x8xf32>
    %152 = math.exp %151 : vector<8x8xf32>
    %cst_57 = arith.constant dense<0.000000e+00> : vector<8xf32>
    %153 = vector.multi_reduction <add>, %152, %cst_57 [1] : vector<8x8xf32> to vector<8xf32>
    %154 = vector.shape_cast %153 : vector<8xf32> to vector<8x1xf32>
    %155 = tpu.reciprocal %154 {approx = true} : vector<8x1xf32> -> vector<8x1xf32>
    %156 = vector.broadcast %155 : vector<8x1xf32> to vector<8x8xf32>
    %157 = arith.mulf %152, %156 : vector<8x8xf32>
    %158 = arith.truncf %157 : vector<8x8xf32> to vector<8x8xbf16>
    %159 = vector.extract_strided_slice %68 {offsets = [0, 24], sizes = [8, 8], strides = [1, 1]} : vector<8x32xbf16> to vector<8x8xbf16>
    %cst_58 = arith.constant dense<0.000000e+00> : vector<8x8xf32>
    %160 = tpu.matmul %158, %159, %cst_58 {dimension_numbers = #tpu.dot_dimension_numbers<[1], [0], [0], [1], [0, 0, 1, 1], [], []>} : vector<8x8xbf16>, vector<8x8xbf16>, vector<8x8xf32> -> vector<8x8xf32>
    %161 = arith.truncf %160 : vector<8x8xf32> to vector<8x8xbf16>
    %c24 = arith.constant 24 : index
    %c0_59 = arith.constant 0 : index
    %162 = vector.load %arg11[%c24, %c0_59] : memref<32x32xbf16, #tpu.memory_space<vmem>>, vector<8x32xbf16>
    %cst_60 = arith.constant dense<0.000000e+00> : vector<8x32xf32>
    %163 = tpu.matmul %161, %162, %cst_60 {dimension_numbers = #tpu.dot_dimension_numbers<[1], [0], [0], [1], [0, 0, 1, 1], [], []>} : vector<8x8xbf16>, vector<8x32xbf16>, vector<8x32xf32> -> vector<8x32xf32>
    %164 = arith.addf %142, %163 : vector<8x32xf32>
    %c0_61 = arith.constant 0 : index
    %c0_62 = arith.constant 0 : index
    %165 = vector.load %arg12[%c0_61, %c0_62] : memref<1x32xf32, #tpu.memory_space<vmem>>, vector<1x32xf32>
    %166 = vector.broadcast %165 : vector<1x32xf32> to vector<8x32xf32>
    %167 = arith.addf %164, %166 : vector<8x32xf32>
    %168 = arith.extf %1 : vector<8x32xbf16> to vector<8x32xf32>
    %169 = arith.addf %168, %167 : vector<8x32xf32>
    %170 = arith.truncf %169 : vector<8x32xf32> to vector<8x32xbf16>
    %c0_63 = arith.constant 0 : index
    %c0_64 = arith.constant 0 : index
    %c0_65 = arith.constant 0 : index
    %171 = vector.load %arg13[%c0_63, %c0_64, %c0_65] : memref<1x8x32xbf16, #tpu.memory_space<vmem>>, vector<1x8x32xbf16>
    %172 = vector.shape_cast %171 : vector<1x8x32xbf16> to vector<8x32xbf16>
    %173 = vector.shape_cast %170 : vector<8x32xbf16> to vector<1x8x32xbf16>
    tpu.vector_store %arg13[%c0_63, %c0_64, %c0_65], %173 {strides = array<i32>} : memref<1x8x32xbf16, #tpu.memory_space<vmem>>, vector<1x8x32xbf16>,
    return
  }
  func.func @transform_0(%arg0: i32, %arg1: i32) -> (i32, i32, i32) {
    %c0_i32 = arith.constant 0 : i32
    %c0_i32_0 = arith.constant 0 : i32
    return %arg0, %arg1, %c0_i32 : i32, i32, i32
  }
  func.func @transform_1(%arg0: i32, %arg1: i32) -> (i32, i32, i32) {
    %c0_i32 = arith.constant 0 : i32
    %c0_i32_0 = arith.constant 0 : i32
    %c0_i32_1 = arith.constant 0 : i32
    return %arg0, %c0_i32, %c0_i32_0 : i32, i32, i32
  }
  func.func @transform_2(%arg0: i32, %arg1: i32) -> (i32, i32, i32, i32) {
    %c0_i32 = arith.constant 0 : i32
    %c0_i32_0 = arith.constant 0 : i32
    %c0_i32_1 = arith.constant 0 : i32
    %c0_i32_2 = arith.constant 0 : i32
    return %arg0, %c0_i32, %c0_i32_0, %c0_i32_1 : i32, i32, i32, i32
  }
  func.func @transform_3(%arg0: i32, %arg1: i32) -> (i32, i32) {
    %c0_i32 = arith.constant 0 : i32
    %c0_i32_0 = arith.constant 0 : i32
    %c0_i32_1 = arith.constant 0 : i32
    return %c0_i32, %c0_i32_0 : i32, i32
  }
  func.func @transform_4(%arg0: i32, %arg1: i32) -> (i32, i32) {
    %c0_i32 = arith.constant 0 : i32
    %c0_i32_0 = arith.constant 0 : i32
    %c0_i32_1 = arith.constant 0 : i32
    return %c0_i32, %c0_i32_0 : i32, i32
  }
  func.func @transform_5(%arg0: i32, %arg1: i32) -> (i32, i32) {
    %c0_i32 = arith.constant 0 : i32
    %c0_i32_0 = arith.constant 0 : i32
    %c0_i32_1 = arith.constant 0 : i32
    return %c0_i32, %c0_i32_0 : i32, i32
  }
  func.func @transform_6(%arg0: i32, %arg1: i32) -> (i32, i32) {
    %c0_i32 = arith.constant 0 : i32
    %c0_i32_0 = arith.constant 0 : i32
    %c0_i32_1 = arith.constant 0 : i32
    return %c0_i32, %c0_i32_0 : i32, i32
  }
  func.func @transform_7(%arg0: i32, %arg1: i32) -> (i32, i32) {
    %c0_i32 = arith.constant 0 : i32
    %c0_i32_0 = arith.constant 0 : i32
    %c0_i32_1 = arith.constant 0 : i32
    return %c0_i32, %c0_i32_0 : i32, i32
  }
  func.func @transform_8(%arg0: i32, %arg1: i32) -> (i32, i32) {
    %c0_i32 = arith.constant 0 : i32
    %c0_i32_0 = arith.constant 0 : i32
    %c0_i32_1 = arith.constant 0 : i32
    return %c0_i32, %c0_i32_0 : i32, i32
  }
  func.func @transform_9(%arg0: i32, %arg1: i32) -> (i32, i32) {
    %c0_i32 = arith.constant 0 : i32
    %c0_i32_0 = arith.constant 0 : i32
    %c0_i32_1 = arith.constant 0 : i32
    return %c0_i32, %c0_i32_0 : i32, i32
  }
  func.func @transform_10(%arg0: i32, %arg1: i32) -> (i32, i32) {
    %c0_i32 = arith.constant 0 : i32
    %c0_i32_0 = arith.constant 0 : i32
    %c0_i32_1 = arith.constant 0 : i32
    return %c0_i32, %c0_i32_0 : i32, i32
  }
  func.func @transform_11(%arg0: i32, %arg1: i32) -> (i32, i32, i32) {
    %c0_i32 = arith.constant 0 : i32
    %c0_i32_0 = arith.constant 0 : i32
    return %arg0, %arg1, %c0_i32 : i32, i32, i32
  }
}

</mosaic_0001>

<llo_original>
// kernel: tpu_custom_call.1
$region0: #{tpu_custom_call.1}
  #allocation0 [shape = 'u32[]', space=smem, size = 0x4, offset = 0x4, fixed_abs, tag = 'smem constant byte address 0x4 - core index']
  #allocation1 [shape = 'u32[72,128]{1,0:T(1,128)}', space=vmem, size = 0x9000, scoped, tag = 'internal scratch']
  %s0 = inlined_call_operand.hbm [shape: bf16[2,8,32], index: 0, kind: input, shape index: {}]
  %s1 = inlined_call_operand.hbm [shape: bf16[2,8,32], index: 1, kind: input, shape index: {}]
  %s2 = inlined_call_operand.hbm [shape: f32[2,1,1,8], index: 2, kind: input, shape index: {}]
  %s3 = inlined_call_operand.vmem [shape: f32[1,32], index: 3, kind: input, shape index: {}]
  %s4 = inlined_call_operand.vmem [shape: f32[1,32], index: 4, kind: input, shape index: {}]
  %s5 = inlined_call_operand.hbm [shape: bf16[32,32], index: 5, kind: input, shape index: {}]
  %s6 = inlined_call_operand.vmem [shape: f32[1,32], index: 6, kind: input, shape index: {}]
  %s7 = inlined_call_operand.hbm [shape: bf16[32,64], index: 7, kind: input, shape index: {}]
  %s8 = inlined_call_operand.vmem [shape: f32[1,64], index: 8, kind: input, shape index: {}]
  %s9 = inlined_call_operand.hbm [shape: bf16[32,32], index: 9, kind: input, shape index: {}]
  %s10 = inlined_call_operand.vmem [shape: f32[1,32], index: 10, kind: input, shape index: {}]
  %s11 = inlined_call_operand.hbm [shape: bf16[2,8,32], index: 11, kind: output, shape index: {}]
  %s12 = sld [smem:[#allocation0]]
  $region101: #{tpu_custom_call.1} parent=0
    _
  %s14 = ssub.s32 1, %s12
  %s15 = scalar_select 0, %s14, %s12
  $region1: #{tpu_custom_call.1} parent=0
    #allocation2 [shape = 'u8[4096]{0}', space=vmem, size = 0x1000, scoped, tag = 'input window, operand 0']
    #allocation3 [shape = 's32[2]{0}', space=sflag, size = 0x8, scoped, tag = 'scoped memory for tpu_custom_call.1']
    #allocation4 [shape = 's32[2]{0}', space=sflag, size = 0x8, scoped, tag = 'scoped memory for tpu_custom_call.1']
    #allocation5 [shape = 'u8[4096]{0}', space=vmem, size = 0x1000, scoped, tag = 'input window, operand 1']
    #allocation6 [shape = 's32[2]{0}', space=sflag, size = 0x8, scoped, tag = 'scoped memory for tpu_custom_call.1']
    #allocation7 [shape = 'u8[1024]{0}', space=vmem, size = 0x400, scoped, tag = 'input window, operand 2']
    #allocation8 [shape = 'u8[8192]{0}', space=vmem, size = 0x2000, scoped, tag = 'input window, operand 5, single buffered']
    #allocation9 [shape = 's32[1]{0}', space=sflag, size = 0x4, scoped, tag = 'scoped memory for tpu_custom_call.1']
    #allocation10 [shape = 'u8[8192]{0}', space=vmem, size = 0x2000, scoped, tag = 'input window, operand 7, single buffered']
    #allocation11 [shape = 'u8[8192]{0}', space=vmem, size = 0x2000, scoped, tag = 'input window, operand 9, single buffered']
    #allocation12 [shape = 's32[1]{0}', space=sflag, size = 0x4, scoped, tag = 'scoped memory for tpu_custom_call.1']
    #allocation13 [shape = 'u8[4096]{0}', space=vmem, size = 0x1000, scoped, tag = 'output window, operand 0']
    %16 = vsyncpa [#allocation3], 0
    %s17 = scalar_lea.sflag [#allocation3], 1
    %18 = vsyncpa %s17, 0
    %19 = vsyncpa [#allocation6], 0
    %s20 = scalar_lea.sflag [#allocation6], 1
    %21 = vsyncpa %s20, 0
    %22 = vsyncpa [#allocation9], 0
    %23 = vsyncpa [#allocation12], 0
    %24 = vsyncpa [#allocation4], 0
    %s25 = scalar_lea.sflag [#allocation4], 1
    %26 = vsyncpa %s25, 0
    loop: start=0, step=1, limit=4
    $region2: #{tpu_custom_call.1} parent=1 // loop_pre_header
      _
    $region3: #{tpu_custom_call.1} parent=1 // loop_header
      %s28 = sphi 0, %s32
      %p29 = scmp.ge.s32.totalorder %s28, 4
      %s35 = sphi 0, %s47
      %s36 = sphi 0, %s43
      %s37 = sphi 0, %s35
      %s38 = sphi 0, %s36
      %s39 = sphi 0, %s37
      %s40 = sphi 0, %s38
      %s52 = sphi 0, %s54
      %s55 = sphi 0, %s52
      %s56 = sphi 0, %s55
      %s72 = sphi 0, %s56
      %s78 = sphi 0, %s80
      %s81 = sphi 0, %s78
      %s82 = sphi 0, %s81
      %s98 = sphi 0, %s82
      %s104 = sphi 0, %s106
      %s107 = sphi 0, %s104
      %s108 = sphi 0, %s107
      %s124 = sphi 0, %s108
      %s128 = sphi 0, %s128
      %s130 = sphi 0, %s128
      %s131 = sphi 0, %s130
      %s145 = sphi 0, %s131
      %s149 = sphi 0, %s149
      %s151 = sphi 0, %s149
      %s152 = sphi 0, %s151
      %s166 = sphi 0, %s152
      %s170 = sphi 0, %s170
      %s172 = sphi 0, %s170
      %s173 = sphi 0, %s172
      %s187 = sphi 0, %s173
      %s191 = sphi 0, %s191
      %s193 = sphi 0, %s191
      %s194 = sphi 0, %s193
      %s208 = sphi 0, %s194
      %s212 = sphi 0, %s212
      %s214 = sphi 0, %s212
      %s215 = sphi 0, %s214
      %s229 = sphi 0, %s215
      %s233 = sphi 0, %s233
      %s235 = sphi 0, %s233
      %s236 = sphi 0, %s235
      %s250 = sphi 0, %s236
      %s254 = sphi 0, %s254
      %s256 = sphi 0, %s254
      %s257 = sphi 0, %s256
      %s271 = sphi 0, %s257
      %s275 = sphi 0, %s275
      %s277 = sphi 0, %s275
      %s278 = sphi 0, %s277
      %s292 = sphi 0, %s278
      %s300 = sphi 0, %s302
      %s303 = sphi 0, %s300
      %s304 = sphi 0, %s303
      %s320 = sphi 0, %s304
    $region4: #{tpu_custom_call.1} parent=1 // loop_header_branch
      %31 = sbr.rel (%p29) target = $region8
    $region5: #{tpu_custom_call.1} parent=1 // loop_body
      %s33 = ssub.s32 %s28, 1
      %s34 = ssub.s32 %s28, 2
      %s41 = sadd.s32 1, %s36
      %p42 = scmp.ge.s32.totalorder %s41, 1
      %s43 = scalar_select %p42, 0, %s41
      %s44 = sadd.s32 1, %s35
      %s45 = scalar_select %p42, %s44, %s35
      %p46 = scmp.ge.s32.totalorder %s45, 2
      %s47 = scalar_select %p46, 0, %s45
      %s48 = ssub.s32 %s35, %s47
      %s49 = ssub.s32 %s36, %s43
      %s50 = sor.u32 %s48, %s49
      %p51 = scmp.eq.s32.totalorder %s50, 0
      %s53 = sadd.s32 %s52, 1
      %s54 = scalar_select %p51, %s52, %s53
      %p57 = pneg %p51
      %p58 = scmp.eq.s32.totalorder %s28, 1
      %p59 = por %p57, %p58
      %p60 = scmp.ne.s32.totalorder %s52, %s55
      %p61 = scmp.eq.s32.totalorder %s28, 0
      %p62 = por %p60, %p61
      %p63 = scmp.ne.s32.totalorder %s52, %s55
      %p64 = scmp.eq.s32.totalorder %s33, 1
      %p65 = por %p63, %p64
      %p66 = scmp.ne.s32.totalorder %s55, %s56
      %p67 = scmp.eq.s32.totalorder %s33, 0
      %p68 = por %p66, %p67
      %p69 = scmp.ne.s32.totalorder %s55, %s56
      %p70 = scmp.eq.s32.totalorder %s34, 1
      %p71 = por %p69, %p70
      %p73 = scmp.ne.s32.totalorder %s56, %s72
      %p74 = scmp.eq.s32.totalorder %s34, 0
      %p75 = por %p73, %p74
      %s76 = ssub.s32 %s35, %s47
      %p77 = scmp.eq.s32.totalorder %s76, 0
      %s79 = sadd.s32 %s78, 1
      %s80 = scalar_select %p77, %s78, %s79
      %p83 = pneg %p77
      %p84 = scmp.eq.s32.totalorder %s28, 1
      %p85 = por %p83, %p84
      %p86 = scmp.ne.s32.totalorder %s78, %s81
      %p87 = scmp.eq.s32.totalorder %s28, 0
      %p88 = por %p86, %p87
      %p89 = scmp.ne.s32.totalorder %s78, %s81
      %p90 = scmp.eq.s32.totalorder %s33, 1
      %p91 = por %p89, %p90
      %p92 = scmp.ne.s32.totalorder %s81, %s82
      %p93 = scmp.eq.s32.totalorder %s33, 0
      %p94 = por %p92, %p93
      %p95 = scmp.ne.s32.totalorder %s81, %s82
      %p96 = scmp.eq.s32.totalorder %s34, 1
      %p97 = por %p95, %p96
      %p99 = scmp.ne.s32.totalorder %s82, %s98
      %p100 = scmp.eq.s32.totalorder %s34, 0
      %p101 = por %p99, %p100
      %s102 = ssub.s32 %s35, %s47
      %p103 = scmp.eq.s32.totalorder %s102, 0
      %s105 = sadd.s32 %s104, 1
      %s106 = scalar_select %p103, %s104, %s105
      %p109 = pneg %p103
      %p110 = scmp.eq.s32.totalorder %s28, 1
      %p111 = por %p109, %p110
      %p112 = scmp.ne.s32.totalorder %s104, %s107
      %p113 = scmp.eq.s32.totalorder %s28, 0
      %p114 = por %p112, %p113
      %p115 = scmp.ne.s32.totalorder %s104, %s107
      %p116 = scmp.eq.s32.totalorder %s33, 1
      %p117 = por %p115, %p116
      %p118 = scmp.ne.s32.totalorder %s107, %s108
      %p119 = scmp.eq.s32.totalorder %s33, 0
      %p120 = por %p118, %p119
      %p121 = scmp.ne.s32.totalorder %s107, %s108
      %p122 = scmp.eq.s32.totalorder %s34, 1
      %p123 = por %p121, %p122
      %p125 = scmp.ne.s32.totalorder %s108, %s124
      %p126 = scmp.eq.s32.totalorder %s34, 0
      %p127 = por %p125, %p126
      %s129 = sadd.s32 %s128, 1
      %p132 = scmp.eq.s32.totalorder %s28, 1
      %p133 = scmp.ne.s32.totalorder %s128, %s130
      %p134 = scmp.eq.s32.totalorder %s28, 0
      %p135 = por %p133, %p134
      %p136 = scmp.ne.s32.totalorder %s128, %s130
      %p137 = scmp.eq.s32.totalorder %s33, 1
      %p138 = por %p136, %p137
      %p139 = scmp.ne.s32.totalorder %s130, %s131
      %p140 = scmp.eq.s32.totalorder %s33, 0
      %p141 = por %p139, %p140
      %p142 = scmp.ne.s32.totalorder %s130, %s131
      %p143 = scmp.eq.s32.totalorder %s34, 1
      %p144 = por %p142, %p143
      %p146 = scmp.ne.s32.totalorder %s131, %s145
      %p147 = scmp.eq.s32.totalorder %s34, 0
      %p148 = por %p146, %p147
      %s150 = sadd.s32 %s149, 1
      %p153 = scmp.eq.s32.totalorder %s28, 1
      %p154 = scmp.ne.s32.totalorder %s149, %s151
      %p155 = scmp.eq.s32.totalorder %s28, 0
      %p156 = por %p154, %p155
      %p157 = scmp.ne.s32.totalorder %s149, %s151
      %p158 = scmp.eq.s32.totalorder %s33, 1
      %p159 = por %p157, %p158
      %p160 = scmp.ne.s32.totalorder %s151, %s152
      %p161 = scmp.eq.s32.totalorder %s33, 0
      %p162 = por %p160, %p161
      %p163 = scmp.ne.s32.totalorder %s151, %s152
      %p164 = scmp.eq.s32.totalorder %s34, 1
      %p165 = por %p163, %p164
      %p167 = scmp.ne.s32.totalorder %s152, %s166
      %p168 = scmp.eq.s32.totalorder %s34, 0
      %p169 = por %p167, %p168
      %s171 = sadd.s32 %s170, 1
      %p174 = scmp.eq.s32.totalorder %s28, 1
      %p175 = scmp.ne.s32.totalorder %s170, %s172
      %p176 = scmp.eq.s32.totalorder %s28, 0
      %p177 = por %p175, %p176
      %p178 = scmp.ne.s32.totalorder %s170, %s172
      %p179 = scmp.eq.s32.totalorder %s33, 1
      %p180 = por %p178, %p179
      %p181 = scmp.ne.s32.totalorder %s172, %s173
      %p182 = scmp.eq.s32.totalorder %s33, 0
      %p183 = por %p181, %p182
      %p184 = scmp.ne.s32.totalorder %s172, %s173
      %p185 = scmp.eq.s32.totalorder %s34, 1
      %p186 = por %p184, %p185
      %p188 = scmp.ne.s32.totalorder %s173, %s187
      %p189 = scmp.eq.s32.totalorder %s34, 0
      %p190 = por %p188, %p189
      %s192 = sadd.s32 %s191, 1
      %p195 = scmp.eq.s32.totalorder %s28, 1
      %p196 = scmp.ne.s32.totalorder %s191, %s193
      %p197 = scmp.eq.s32.totalorder %s28, 0
      %p198 = por %p196, %p197
      %p199 = scmp.ne.s32.totalorder %s191, %s193
      %p200 = scmp.eq.s32.totalorder %s33, 1
      %p201 = por %p199, %p200
      %p202 = scmp.ne.s32.totalorder %s193, %s194
      %p203 = scmp.eq.s32.totalorder %s33, 0
      %p204 = por %p202, %p203
      %p205 = scmp.ne.s32.totalorder %s193, %s194
      %p206 = scmp.eq.s32.totalorder %s34, 1
      %p207 = por %p205, %p206
      %p209 = scmp.ne.s32.totalorder %s194, %s208
      %p210 = scmp.eq.s32.totalorder %s34, 0
      %p211 = por %p209, %p210
      %s213 = sadd.s32 %s212, 1
      %p216 = scmp.eq.s32.totalorder %s28, 1
      %p217 = scmp.ne.s32.totalorder %s212, %s214
      %p218 = scmp.eq.s32.totalorder %s28, 0
      %p219 = por %p217, %p218
      %p220 = scmp.ne.s32.totalorder %s212, %s214
      %p221 = scmp.eq.s32.totalorder %s33, 1
      %p222 = por %p220, %p221
      %p223 = scmp.ne.s32.totalorder %s214, %s215
      %p224 = scmp.eq.s32.totalorder %s33, 0
      %p225 = por %p223, %p224
      %p226 = scmp.ne.s32.totalorder %s214, %s215
      %p227 = scmp.eq.s32.totalorder %s34, 1
      %p228 = por %p226, %p227
      %p230 = scmp.ne.s32.totalorder %s215, %s229
      %p231 = scmp.eq.s32.totalorder %s34, 0
      %p232 = por %p230, %p231
      %s234 = sadd.s32 %s233, 1
      %p237 = scmp.eq.s32.totalorder %s28, 1
      %p238 = scmp.ne.s32.totalorder %s233, %s235
      %p239 = scmp.eq.s32.totalorder %s28, 0
      %p240 = por %p238, %p239
      %p241 = scmp.ne.s32.totalorder %s233, %s235
      %p242 = scmp.eq.s32.totalorder %s33, 1
      %p243 = por %p241, %p242
      %p244 = scmp.ne.s32.totalorder %s235, %s236
      %p245 = scmp.eq.s32.totalorder %s33, 0
      %p246 = por %p244, %p245
      %p247 = scmp.ne.s32.totalorder %s235, %s236
      %p248 = scmp.eq.s32.totalorder %s34, 1
      %p249 = por %p247, %p248
      %p251 = scmp.ne.s32.totalorder %s236, %s250
      %p252 = scmp.eq.s32.totalorder %s34, 0
      %p253 = por %p251, %p252
      %s255 = sadd.s32 %s254, 1
      %p258 = scmp.eq.s32.totalorder %s28, 1
      %p259 = scmp.ne.s32.totalorder %s254, %s256
      %p260 = scmp.eq.s32.totalorder %s28, 0
      %p261 = por %p259, %p260
      %p262 = scmp.ne.s32.totalorder %s254, %s256
      %p263 = scmp.eq.s32.totalorder %s33, 1
      %p264 = por %p262, %p263
      %p265 = scmp.ne.s32.totalorder %s256, %s257
      %p266 = scmp.eq.s32.totalorder %s33, 0
      %p267 = por %p265, %p266
      %p268 = scmp.ne.s32.totalorder %s256, %s257
      %p269 = scmp.eq.s32.totalorder %s34, 1
      %p270 = por %p268, %p269
      %p272 = scmp.ne.s32.totalorder %s257, %s271
      %p273 = scmp.eq.s32.totalorder %s34, 0
      %p274 = por %p272, %p273
      %s276 = sadd.s32 %s275, 1
      %p279 = scmp.eq.s32.totalorder %s28, 1
      %p280 = scmp.ne.s32.totalorder %s275, %s277
      %p281 = scmp.eq.s32.totalorder %s28, 0
      %p282 = por %p280, %p281
      %p283 = scmp.ne.s32.totalorder %s275, %s277
      %p284 = scmp.eq.s32.totalorder %s33, 1
      %p285 = por %p283, %p284
      %p286 = scmp.ne.s32.totalorder %s277, %s278
      %p287 = scmp.eq.s32.totalorder %s33, 0
      %p288 = por %p286, %p287
      %p289 = scmp.ne.s32.totalorder %s277, %s278
      %p290 = scmp.eq.s32.totalorder %s34, 1
      %p291 = por %p289, %p290
      %p293 = scmp.ne.s32.totalorder %s278, %s292
      %p294 = scmp.eq.s32.totalorder %s34, 0
      %p295 = por %p293, %p294
      %s296 = ssub.s32 %s35, %s47
      %s297 = ssub.s32 %s36, %s43
      %s298 = sor.u32 %s296, %s297
      %p299 = scmp.eq.s32.totalorder %s298, 0
      %s301 = sadd.s32 %s300, 1
      %s302 = scalar_select %p299, %s300, %s301
      %p305 = pneg %p299
      %p306 = scmp.eq.s32.totalorder %s28, 1
      %p307 = por %p305, %p306
      %p308 = scmp.ne.s32.totalorder %s300, %s303
      %p309 = scmp.eq.s32.totalorder %s28, 0
      %p310 = por %p308, %p309
      %p311 = scmp.ne.s32.totalorder %s300, %s303
      %p312 = scmp.eq.s32.totalorder %s33, 1
      %p313 = por %p311, %p312
      %p314 = scmp.ne.s32.totalorder %s303, %s304
      %p315 = scmp.eq.s32.totalorder %s33, 0
      %p316 = por %p314, %p315
      %p317 = scmp.ne.s32.totalorder %s303, %s304
      %p318 = scmp.eq.s32.totalorder %s34, 1
      %p319 = por %p317, %p318
      %p321 = scmp.ne.s32.totalorder %s304, %s320
      %p322 = scmp.eq.s32.totalorder %s34, 0
      %p323 = por %p321, %p322
      %p324 = scmp.le.s32.totalorder 1, %s28
      %p325 = scmp.lt.s32.totalorder %s28, 3
      %p326 = pnand %p324, %p325
      %p327 = pneg %p326
      // Predicated region
      $region9: #{tpu_custom_call.1} parent=5 // pred_check
        _
      $region10: #{tpu_custom_call.1} parent=5 // pred_check_branch
        %329 = sbr.rel (%p326) target = $region12
      $region11: #{tpu_custom_call.1} parent=5 // pred_region
        %s330 = ssub.s32 %s28, 1
        // Predicated region
        $region13: #{tpu_custom_call.1} parent=11 // pred_check
          %p331 = pneg %p141
        $region14: #{tpu_custom_call.1} parent=11 // pred_check_branch
          %333 = sbr.rel (%p331) target = $region16
        $region15: #{tpu_custom_call.1} parent=11 // pred_region
          _
        $region16: #{tpu_custom_call.1} parent=11 // pred_fallthru
          _
        // Predicated region
        $region17: #{tpu_custom_call.1} parent=11 // pred_check
          %p334 = pneg %p162
        $region18: #{tpu_custom_call.1} parent=11 // pred_check_branch
          %336 = sbr.rel (%p334) target = $region20
        $region19: #{tpu_custom_call.1} parent=11 // pred_region
          _
        $region20: #{tpu_custom_call.1} parent=11 // pred_fallthru
          _
        // Predicated region
        $region21: #{tpu_custom_call.1} parent=11 // pred_check
          %p337 = pneg %p183
        $region22: #{tpu_custom_call.1} parent=11 // pred_check_branch
          %339 = sbr.rel (%p337) target = $region24
        $region23: #{tpu_custom_call.1} parent=11 // pred_region
          %341 = vsyncadd [#allocation9], 0
          %s342 = sshll.u32 %s5, 4
          %s343 = int_to_ptr.hbm [resolvable:$true] %s342
          %s344 = sshll.u32 [#allocation8], 4
          %s345 = int_to_ptr.vmem [resolvable:$true] %s344
          %350 = dma.hbm_to_vmem [thread:$0]  %s343, 256, %s345, [#allocation9], 64, 64, 4
        $region24: #{tpu_custom_call.1} parent=11 // pred_fallthru
          _
        // Predicated region
        $region25: #{tpu_custom_call.1} parent=11 // pred_check
          %p351 = pneg %p204
        $region26: #{tpu_custom_call.1} parent=11 // pred_check_branch
          %353 = sbr.rel (%p351) target = $region28
        $region27: #{tpu_custom_call.1} parent=11 // pred_region
          _
        $region28: #{tpu_custom_call.1} parent=11 // pred_fallthru
          _
        // Predicated region
        $region29: #{tpu_custom_call.1} parent=11 // pred_check
          %p354 = pneg %p225
        $region30: #{tpu_custom_call.1} parent=11 // pred_check_branch
          %356 = sbr.rel (%p354) target = $region32
        $region31: #{tpu_custom_call.1} parent=11 // pred_region
          %358 = vsyncadd [#allocation9], 0
          %s359 = sshll.u32 %s7, 4
          %s360 = int_to_ptr.hbm [resolvable:$true] %s359
          %s361 = sshll.u32 [#allocation10], 4
          %s362 = int_to_ptr.vmem [resolvable:$true] %s361
          %367 = dma.hbm_to_vmem [thread:$0]  %s360, 256, %s362, [#allocation9], 64, 64, 4
        $region32: #{tpu_custom_call.1} parent=11 // pred_fallthru
          _
        // Predicated region
        $region33: #{tpu_custom_call.1} parent=11 // pred_check
          %p368 = pneg %p246
        $region34: #{tpu_custom_call.1} parent=11 // pred_check_branch
          %370 = sbr.rel (%p368) target = $region36
        $region35: #{tpu_custom_call.1} parent=11 // pred_region
          _
        $region36: #{tpu_custom_call.1} parent=11 // pred_fallthru
          _
        // Predicated region
        $region37: #{tpu_custom_call.1} parent=11 // pred_check
          %p371 = pneg %p267
        $region38: #{tpu_custom_call.1} parent=11 // pred_check_branch
          %373 = sbr.rel (%p371) target = $region40
        $region39: #{tpu_custom_call.1} parent=11 // pred_region
          %375 = vsyncadd [#allocation12], 0
          %s376 = sshll.u32 %s9, 4
          %s377 = int_to_ptr.hbm [resolvable:$true] %s376
          %s378 = sshll.u32 [#allocation11], 4
          %s379 = int_to_ptr.vmem [resolvable:$true] %s378
          %384 = dma.hbm_to_vmem [thread:$0]  %s377, 256, %s379, [#allocation12], 64, 64, 4
        $region40: #{tpu_custom_call.1} parent=11 // pred_fallthru
          _
        // Predicated region
        $region41: #{tpu_custom_call.1} parent=11 // pred_check
          %p385 = pneg %p288
        $region42: #{tpu_custom_call.1} parent=11 // pred_check_branch
          %387 = sbr.rel (%p385) target = $region44
        $region43: #{tpu_custom_call.1} parent=11 // pred_region
          _
        $region44: #{tpu_custom_call.1} parent=11 // pred_fallthru
          _
      $region12: #{tpu_custom_call.1} parent=5 // pred_fallthru
        _
      %p388 = scmp.lt.s32.totalorder %s28, 2
      // Predicated region
      $region45: #{tpu_custom_call.1} parent=5 // pred_check
        %p389 = pneg %p388
      $region46: #{tpu_custom_call.1} parent=5 // pred_check_branch
        %391 = sbr.rel (%p389) target = $region48
      $region47: #{tpu_custom_call.1} parent=5 // pred_region
        // Predicated region
        $region49: #{tpu_custom_call.1} parent=47 // pred_check
          %p392 = pneg %p62
        $region50: #{tpu_custom_call.1} parent=47 // pred_check_branch
          %394 = sbr.rel (%p392) target = $region52
        $region51: #{tpu_custom_call.1} parent=47 // pred_region
          %s395 = sand.u32 %s52, 1
          %s396 = scalar_lea.sflag [#allocation3], %s395
          %s397 = sand.u32 %s52, 1
          %s398 = smul.addr %s397, 4
          %s399 = scalar_lea.vmem [#allocation2], %s398
          %401 = vsyncadd %s396, 0
          %s402 = sadd.s32 %s36, %s35
          %s403 = smul.addr %s402, 4
          %s404 = scalar_lea.hbm %s0, %s403
          %s406 = sshll.u32 %s404, 4
          %s407 = int_to_ptr.hbm [resolvable:$true] %s406
          %s408 = sshll.u32 %s399, 4
          %s409 = int_to_ptr.vmem [resolvable:$true] %s408
          %411 = dma.hbm_to_vmem [thread:$0]  %s407, 64, %s409, %s396
        $region52: #{tpu_custom_call.1} parent=47 // pred_fallthru
          _
        // Predicated region
        $region53: #{tpu_custom_call.1} parent=47 // pred_check
          %p412 = pneg %p88
        $region54: #{tpu_custom_call.1} parent=47 // pred_check_branch
          %414 = sbr.rel (%p412) target = $region56
        $region55: #{tpu_custom_call.1} parent=47 // pred_region
          %s415 = sand.u32 %s28, 1
          %s416 = scalar_lea.sflag [#allocation6], %s415
          %s417 = sand.u32 %s78, 1
          %s418 = smul.addr %s417, 4
          %s419 = scalar_lea.vmem [#allocation5], %s418
          %421 = vsyncadd %s416, 0
          %s422 = smul.addr %s35, 4
          %s423 = scalar_lea.hbm %s1, %s422
          %s425 = sshll.u32 %s423, 4
          %s426 = int_to_ptr.hbm [resolvable:$true] %s425
          %s427 = sshll.u32 %s419, 4
          %s428 = int_to_ptr.vmem [resolvable:$true] %s427
          %430 = dma.hbm_to_vmem [thread:$0]  %s426, 64, %s428, %s416
        $region56: #{tpu_custom_call.1} parent=47 // pred_fallthru
          _
        // Predicated region
        $region57: #{tpu_custom_call.1} parent=47 // pred_check
          %p431 = pneg %p114
        $region58: #{tpu_custom_call.1} parent=47 // pred_check_branch
          %433 = sbr.rel (%p431) target = $region60
        $region59: #{tpu_custom_call.1} parent=47 // pred_region
          %s434 = sand.u32 %s28, 1
          %s435 = scalar_lea.sflag [#allocation6], %s434
          %s436 = sand.u32 %s104, 1
          %s437 = scalar_lea.vmem [#allocation7], %s436
          %439 = vsyncadd %s435, 0
          %s440 = scalar_lea.hbm %s2, %s35
          %s442 = sshll.u32 %s440, 4
          %s443 = int_to_ptr.hbm [resolvable:$true] %s442
          %s444 = sshll.u32 %s437, 4
          %s445 = int_to_ptr.vmem [resolvable:$true] %s444
          %447 = dma.hbm_to_vmem [thread:$0]  %s443, 16, %s445, %s435
        $region60: #{tpu_custom_call.1} parent=47 // pred_fallthru
          _
      $region48: #{tpu_custom_call.1} parent=5 // pred_fallthru
        _
      %p448 = scmp.le.s32.totalorder 1, %s28
      %p449 = scmp.lt.s32.totalorder %s28, 3
      %p450 = pnand %p448, %p449
      %p451 = pneg %p450
      // Predicated region
      $region61: #{tpu_custom_call.1} parent=5 // pred_check
        _
      $region62: #{tpu_custom_call.1} parent=5 // pred_check_branch
        %453 = sbr.rel (%p450) target = $region64
      $region63: #{tpu_custom_call.1} parent=5 // pred_region
        %s454 = ssub.s32 %s28, 1
        %s455 = sand.u32 %s55, 1
        %s456 = scalar_lea.sflag [#allocation3], %s455
        %s457 = sand.u32 %s55, 1
        %s458 = smul.addr %s457, 4
        %s459 = scalar_lea.vmem [#allocation2], %s458
        // Predicated region
        $region65: #{tpu_custom_call.1} parent=63 // pred_check
          %p460 = pneg %p68
        $region66: #{tpu_custom_call.1} parent=63 // pred_check_branch
          %462 = sbr.rel (%p460) target = $region68
        $region67: #{tpu_custom_call.1} parent=63 // pred_region
          %464 = dma.done %s456, 64
        $region68: #{tpu_custom_call.1} parent=63 // pred_fallthru
          _
        %s465 = sand.u32 %s33, 1
        %s466 = scalar_lea.sflag [#allocation6], %s465
        %s467 = sand.u32 %s81, 1
        %s468 = smul.addr %s467, 4
        %s469 = scalar_lea.vmem [#allocation5], %s468
        // Predicated region
        $region69: #{tpu_custom_call.1} parent=63 // pred_check
          %p470 = pneg %p94
        $region70: #{tpu_custom_call.1} parent=63 // pred_check_branch
          %472 = sbr.rel (%p470) target = $region72
        $region71: #{tpu_custom_call.1} parent=63 // pred_region
          %474 = dma.done %s466, 64
        $region72: #{tpu_custom_call.1} parent=63 // pred_fallthru
          _
        %s475 = sand.u32 %s33, 1
        %s476 = scalar_lea.sflag [#allocation6], %s475
        %s477 = sand.u32 %s107, 1
        %s478 = scalar_lea.vmem [#allocation7], %s477
        // Predicated region
        $region73: #{tpu_custom_call.1} parent=63 // pred_check
          %p479 = pneg %p120
        $region74: #{tpu_custom_call.1} parent=63 // pred_check_branch
          %481 = sbr.rel (%p479) target = $region76
        $region75: #{tpu_custom_call.1} parent=63 // pred_region
          %483 = dma.done %s476, 16
        $region76: #{tpu_custom_call.1} parent=63 // pred_fallthru
          _
        // Predicated region
        $region77: #{tpu_custom_call.1} parent=63 // pred_check
          %p484 = pneg %p183
        $region78: #{tpu_custom_call.1} parent=63 // pred_check_branch
          %486 = sbr.rel (%p484) target = $region80
        $region79: #{tpu_custom_call.1} parent=63 // pred_region
          %488 = dma.done [#allocation9], 256
        $region80: #{tpu_custom_call.1} parent=63 // pred_fallthru
          _
        // Predicated region
        $region81: #{tpu_custom_call.1} parent=63 // pred_check
          %p489 = pneg %p225
        $region82: #{tpu_custom_call.1} parent=63 // pred_check_branch
          %491 = sbr.rel (%p489) target = $region84
        $region83: #{tpu_custom_call.1} parent=63 // pred_region
          %493 = dma.done [#allocation9], 256
        $region84: #{tpu_custom_call.1} parent=63 // pred_fallthru
          _
        // Predicated region
        $region85: #{tpu_custom_call.1} parent=63 // pred_check
          %p494 = pneg %p267
        $region86: #{tpu_custom_call.1} parent=63 // pred_check_branch
          %496 = sbr.rel (%p494) target = $region88
        $region87: #{tpu_custom_call.1} parent=63 // pred_region
          %498 = dma.done [#allocation12], 256
        $region88: #{tpu_custom_call.1} parent=63 // pred_fallthru
          _
        %s499 = sand.u32 %s55, 1
        %s500 = scalar_lea.sflag [#allocation3], %s499
        %s501 = sand.u32 %s55, 1
        %s502 = smul.addr %s501, 4
        %s503 = scalar_lea.vmem [#allocation2], %s502
        %p504 = pneg %p68
        %p505 = pneg %p65
        %s506 = sand.u32 %s33, 1
        %s507 = scalar_lea.sflag [#allocation6], %s506
        %s508 = sand.u32 %s81, 1
        %s509 = smul.addr %s508, 4
        %s510 = scalar_lea.vmem [#allocation5], %s509
        %p511 = pneg %p94
        %p512 = pneg %p91
        %s513 = sand.u32 %s33, 1
        %s514 = scalar_lea.sflag [#allocation6], %s513
        %s515 = sand.u32 %s107, 1
        %s516 = scalar_lea.vmem [#allocation7], %s515
        %p517 = pneg %p120
        %p518 = pneg %p117
        %p519 = pneg %p141
        %p520 = pneg %p138
        %p521 = pneg %p162
        %p522 = pneg %p159
        %p523 = pneg %p183
        %p524 = pneg %p180
        %p525 = pneg %p204
        %p526 = pneg %p201
        %p527 = pneg %p225
        %p528 = pneg %p222
        %p529 = pneg %p246
        %p530 = pneg %p243
        %p531 = pneg %p267
        %p532 = pneg %p264
        %p533 = pneg %p288
        %p534 = pneg %p285
        %p535 = pneg %p316
        %p536 = pneg %p313
        %s537 = sand.u32 %s303, 1
        %s538 = scalar_lea.sflag [#allocation4], %s537
        %s539 = sand.u32 %s303, 1
        %s540 = smul.addr %s539, 4
        %s541 = scalar_lea.vmem [#allocation13], %s540
        %v543 = vld [vmem:[%s459] sm:$0xf]
        %v544 = vld [vmem:[%s469] sm:$0xf]
        %v545 = vld [vmem:[%s3] sm:$0x1]
        %v546 = vld [vmem:[%s4] sm:$0x1]
        %v547 = vunpack.c.l.bf16 %v543
        %vm548 = vcmask 261120
        %v549 = vsel %vm548, %v547, 0.0
        %550 = vadd.xlane.f32.xlu0 %v549
        %v551 = vpop.xlane.xlu0 %550
        %v552 = vrcp.pop 32.0
        %v553 = vmul.f32 32.0, %v552
        %v554 = vsub.f32 1.0, %v553
        %v555 = vmul.f32 %v552, %v554
        %v556 = vadd.f32 %v552, %v555
        %vm557 = vweird.f32 %v552
        %v558 = vsel %vm557, %v552, %v556
        %v559 = vmul.f32 %v551, %v558
        %v560 = vsub.f32 %v547, %v559
        %v561 = vmul.f32 %v560, %v560
        %v562 = vsel %vm548, %v561, 0.0
        %563 = vadd.xlane.f32.xlu0 %v562
        %v564 = vpop.xlane.xlu0 %563
        %v565 = vrcp.pop 31.0
        %v566 = vmul.f32 31.0, %v565
        %v567 = vsub.f32 1.0, %v566
        %v568 = vmul.f32 %v565, %v567
        %v569 = vadd.f32 %v565, %v568
        %vm570 = vweird.f32 %v565
        %v571 = vsel %vm570, %v565, %v569
        %v572 = vmul.f32 %v564, %v571
        %v574 = vperm.slane %v545, 0
        %v576 = vmul.f32 %v574, %v560
        %v577 = vrsqrt.pop %v572
        %v578 = vmul.f32 %v577, %v572
        %v579 = vmul.f32 %v578, %v577
        %v580 = vmul.f32 0.5, %v579
        %v581 = vsub.f32 1.5, %v580
        %v582 = vmul.f32 %v577, %v581
        %v583 = vmul.f32 %v572, %v582
        %vm584 = vcmp.eq.f32.partialorder %v572, inf
        %v585 = vsel %vm584, %v572, %v583
        %vm586 = vcmp.eq.f32.partialorder %v572, 0.0
        %v587 = vand.u32 %v572, 2147483648
        %v588 = vsel %vm586, %v587, %v585
        %v589 = vadd.f32 %v588, 1e-06
        %v590 = vrcp.pop %v589
        %v591 = vmul.f32 %v589, %v590
        %v592 = vsub.f32 1.0, %v591
        %v593 = vmul.f32 %v590, %v592
        %v594 = vadd.f32 %v590, %v593
        %vm595 = vweird.f32 %v589
        %vm596 = vweird.f32 %v590
        %vm597 = vmor %vm595, %vm596
        %v598 = vsel %vm597, %v590, %v594
        %v599 = vand.u32 2147483647, %v589
        %vm600 = vcmp.eq.f32.partialorder %v599, 8.507059e+37
        %v601 = vand.u32 %v589, 2147483648
        %v602 = vor.u32 1.1754944e-38, %v601
        %v603 = vsel %vm600, %v602, %v598
        %v604 = vmul.f32 %v576, %v603
        %v606 = vperm.slane %v546, 0
        %v608 = vadd.f32 %v604, %v606
        %v609 = vpack.c.bf16 %v608, %v608
        %v610 = vunpack.c.l.bf16 %v544
        %v611 = vsel %vm548, %v610, 0.0
        %612 = vadd.xlane.f32.xlu0 %v611
        %v613 = vpop.xlane.xlu0 %612
        %v614 = vmul.f32 %v613, %v558
        %v615 = vsub.f32 %v610, %v614
        %v616 = vmul.f32 %v615, %v615
        %v617 = vsel %vm548, %v616, 0.0
        %618 = vadd.xlane.f32.xlu0 %v617
        %v619 = vpop.xlane.xlu0 %618
        %v620 = vmul.f32 %v619, %v571
        %v621 = vmul.f32 %v574, %v615
        %v622 = vrsqrt.pop %v620
        %v623 = vmul.f32 %v622, %v620
        %v624 = vmul.f32 %v623, %v622
        %v625 = vmul.f32 0.5, %v624
        %v626 = vsub.f32 1.5, %v625
        %v627 = vmul.f32 %v622, %v626
        %v628 = vmul.f32 %v620, %v627
        %vm629 = vcmp.eq.f32.partialorder %v620, inf
        %v630 = vsel %vm629, %v620, %v628
        %vm631 = vcmp.eq.f32.partialorder %v620, 0.0
        %v632 = vand.u32 %v620, 2147483648
        %v633 = vsel %vm631, %v632, %v630
        %v634 = vadd.f32 %v633, 1e-06
        %v635 = vrcp.pop %v634
        %v636 = vmul.f32 %v634, %v635
        %v637 = vsub.f32 1.0, %v636
        %v638 = vmul.f32 %v635, %v637
        %v639 = vadd.f32 %v635, %v638
        %vm640 = vweird.f32 %v634
        %vm641 = vweird.f32 %v635
        %vm642 = vmor %vm640, %vm641
        %v643 = vsel %vm642, %v635, %v639
        %v644 = vand.u32 2147483647, %v634
        %vm645 = vcmp.eq.f32.partialorder %v644, 8.507059e+37
        %v646 = vand.u32 %v634, 2147483648
        %v647 = vor.u32 1.1754944e-38, %v646
        %v648 = vsel %vm645, %v647, %v643
        %v649 = vmul.f32 %v621, %v648
        %v650 = vadd.f32 %v649, %v606
        %v651 = vpack.c.bf16 %v650, %v650
        %v652 = vld [vmem:[#allocation8] sm:$0xf]
        %v653 = vld [vmem:[#allocation8 + $0x4] sm:$0xf]
        %v654 = vld [vmem:[#allocation8 + $0x8] sm:$0xf]
        %v655 = vld [vmem:[#allocation8 + $0xc] sm:$0xf]
        %v656 = vld [vmem:[%s6] sm:$0x1]
        %v658 = vperm.slane %v656, 0
        %v664 = vunpack.c.l.b16 %v652
        %v665 = vunpack.c.l.b16 %v653
        %v666 = vunpack.c.l.b16 %v654
        %v667 = vunpack.c.l.b16 %v655
        %v668 = vpack.c.b16 %v665, %v664
        %v669 = vpack.c.b16 %v667, %v666
        %v673 = vsel %vm548, %v609, 0
        %675 = vmatpush.bf16.msra.mxu0 0
        %676 = vmatpush.bf16.msra.mxu0 0
        %677 = vmatpush.bf16.msra.mxu0 0
        %678 = vmatpush.bf16.msra.mxu0 0
        %679 = vmatpush.bf16.msra.mxu0 0
        %680 = vmatpush.bf16.msra.mxu0 0
        %681 = vmatpush.bf16.msra.mxu0 %v669
        %682 = vmatpush.bf16.msra.mxu0 %v668
        %683 = vmatmul.bf16.gmra.mxu0 %v673
        %v684 = vpop.f32.mrf.mxu0
        %v685 = vadd.f32 %v658, %v684
        %v686 = vpop.f32.mrf.mxu0
        %687 = vdwg.mxu0
        %v688 = vpack.c.bf16 %v685, %v685
        %v689 = vld [vmem:[#allocation10] sm:$0xf]
        %v690 = vld [vmem:[#allocation10 + $0x4] sm:$0xf]
        %v691 = vld [vmem:[#allocation10 + $0x8] sm:$0xf]
        %v692 = vld [vmem:[#allocation10 + $0xc] sm:$0xf]
        %v693 = vld [vmem:[%s8] sm:$0x1]
        %v695 = vperm.slane %v693, 0
        %v701 = vunpack.c.l.b16 %v689
        %v702 = vunpack.c.l.b16 %v690
        %v703 = vunpack.c.l.b16 %v691
        %v704 = vunpack.c.l.b16 %v692
        %v705 = vpack.c.b16 %v702, %v701
        %v706 = vpack.c.b16 %v704, %v703
        %v710 = vsel %vm548, %v651, 0
        %712 = vmatpush.bf16.msra.mxu0 0
        %713 = vmatpush.bf16.msra.mxu0 0
        %714 = vmatpush.bf16.msra.mxu0 0
        %715 = vmatpush.bf16.msra.mxu0 0
        %716 = vmatpush.bf16.msra.mxu0 0
        %717 = vmatpush.bf16.msra.mxu0 0
        %718 = vmatpush.bf16.msra.mxu0 %v706
        %719 = vmatpush.bf16.msra.mxu0 %v705
        %720 = vmatmul.bf16.gmra.mxu0 %v710
        %v721 = vpop.f32.mrf.mxu0
        %v722 = vadd.f32 %v695, %v721
        %v723 = vpop.f32.mrf.mxu0
        %724 = vdwg.mxu0
        %v725 = vpack.c.bf16 %v722, %v722
        %v726 = vld [vmem:[%s478] sm:$0x1]
        %vm727 = vcmp.eq.f32.partialorder %v726, 0.0
        %v728 = vsel %vm727, -1e+09, 0.0
        %v730 = vperm.slane %v728, 0
        %vm732 = vcmask 64512
        %v734 = vsel %vm732, %v688, 0
        %v737 = vsel %vm732, %v725, 0
        %739 = vmatpush.bf16.xpose.msra.mxu0 0
        %740 = vmatpush.bf16.xpose.msra.mxu0 0
        %741 = vmatpush.bf16.xpose.msra.mxu0 0
        %742 = vmatpush.bf16.xpose.msra.mxu0 0
        %743 = vmatpush.bf16.xpose.msra.mxu0 0
        %744 = vmatpush.bf16.xpose.msra.mxu0 0
        %745 = vmatpush.bf16.xpose.msra.mxu0 0
        %746 = vmatpush.bf16.xpose.msra.mxu0 %v737
        %747 = vmatmul.bf16.gmra.mxu0 %v734
        %v748 = vpop.f32.mrf.mxu0
        %v749 = vadd.f32 %v730, %v748
        %v750 = vpop.f32.mrf.mxu0
        %751 = vdwg.mxu0
        %v752 = vsel %vm732, %v749, -inf
        %753 = vmax.xlane.f32.xlu0 %v752
        %v754 = vpop.xlane.xlu0 %753
        %v755 = vsub.f32 %v749, %v754
        %v756 = vmul.f32 %v755, 1.442695
        %v757 = vpow.pop %v756
        %v758 = vsel %vm732, %v757, 0.0
        %759 = vadd.xlane.f32.xlu0 %v758
        %v760 = vpop.xlane.xlu0 %759
        %v761 = vrcp.pop %v760
        %v762 = vmul.f32 %v757, %v761
        %v763 = vpack.c.bf16 %v762, %v762
        %v765 = vunpack.c.l.b16 %v725
        %v766 = vpack.c.b16 %v765, %v765
        %767 = vrot.lane.b32.xlu0 %v766, 96
        %v768 = vpop.permute.xlu0 %767
        %v770 = vsel %vm732, %v763, 0
        %vm772 = vcmask 1043456
        %v774 = vsel %vm772, %v768, 0
        %776 = vmatpush.bf16.msra.mxu0 0
        %777 = vmatpush.bf16.msra.mxu0 0
        %778 = vmatpush.bf16.msra.mxu0 0
        %779 = vmatpush.bf16.msra.mxu0 0
        %780 = vmatpush.bf16.msra.mxu0 0
        %781 = vmatpush.bf16.msra.mxu0 0
        %782 = vmatpush.bf16.msra.mxu0 0
        %783 = vmatpush.bf16.msra.mxu0 %v774
        %784 = vmatmul.bf16.gmra.mxu0 %v770
        %v785 = vpop.f32.mrf.mxu0
        %v786 = vadd.f32 0.0, %v785
        %v787 = vpop.f32.mrf.mxu0
        %788 = vdwg.mxu0
        %v789 = vpack.c.bf16 %v786, %v786
        %v790 = vld [vmem:[#allocation11] sm:$0xf]
        %v792 = vunpack.c.l.b16 %v688
        %v793 = vpack.c.b16 %v792, %v792
        %794 = vrot.lane.b32.xlu0 %v793, 120
        %v795 = vpop.permute.xlu0 %794
        %796 = vrot.lane.b32.xlu0 %v766, 120
        %v797 = vpop.permute.xlu0 %796
        %v799 = vsel %vm732, %v795, 0
        %v802 = vsel %vm732, %v797, 0
        %804 = vmatpush.bf16.xpose.msra.mxu0 0
        %805 = vmatpush.bf16.xpose.msra.mxu0 0
        %806 = vmatpush.bf16.xpose.msra.mxu0 0
        %807 = vmatpush.bf16.xpose.msra.mxu0 0
        %808 = vmatpush.bf16.xpose.msra.mxu0 0
        %809 = vmatpush.bf16.xpose.msra.mxu0 0
        %810 = vmatpush.bf16.xpose.msra.mxu0 0
        %811 = vmatpush.bf16.xpose.msra.mxu0 %v802
        %812 = vmatmul.bf16.gmra.mxu0 %v799
        %v813 = vpop.f32.mrf.mxu0
        %v814 = vadd.f32 %v730, %v813
        %v815 = vpop.f32.mrf.mxu0
        %816 = vdwg.mxu0
        %v817 = vsel %vm732, %v814, -inf
        %818 = vmax.xlane.f32.xlu0 %v817
        %v819 = vpop.xlane.xlu0 %818
        %v820 = vsub.f32 %v814, %v819
        %v821 = vmul.f32 %v820, 1.442695
        %v822 = vpow.pop %v821
        %v823 = vsel %vm732, %v822, 0.0
        %824 = vadd.xlane.f32.xlu0 %v823
        %v825 = vpop.xlane.xlu0 %824
        %v826 = vrcp.pop %v825
        %v827 = vmul.f32 %v822, %v826
        %v828 = vpack.c.bf16 %v827, %v827
        %829 = vrot.lane.b32.xlu0 %v766, 88
        %v830 = vpop.permute.xlu0 %829
        %v832 = vsel %vm732, %v828, 0
        %v835 = vsel %vm772, %v830, 0
        %837 = vmatpush.bf16.msra.mxu0 0
        %838 = vmatpush.bf16.msra.mxu0 0
        %839 = vmatpush.bf16.msra.mxu0 0
        %840 = vmatpush.bf16.msra.mxu0 0
        %841 = vmatpush.bf16.msra.mxu0 0
        %842 = vmatpush.bf16.msra.mxu0 0
        %843 = vmatpush.bf16.msra.mxu0 0
        %844 = vmatpush.bf16.msra.mxu0 %v835
        %845 = vmatmul.bf16.gmra.mxu0 %v832
        %v846 = vpop.f32.mrf.mxu0
        %v847 = vadd.f32 0.0, %v846
        %v848 = vpop.f32.mrf.mxu0
        %849 = vdwg.mxu0
        %v850 = vpack.c.bf16 %v847, %v847
        %v851 = vld [vmem:[#allocation11 + $0x4] sm:$0xf]
        %v853 = vsel %vm732, %v850, 0
        %v856 = vsel %vm772, %v851, 0
        %858 = vmatpush.bf16.msra.mxu0 0
        %859 = vmatpush.bf16.msra.mxu0 0
        %860 = vmatpush.bf16.msra.mxu0 0
        %861 = vmatpush.bf16.msra.mxu0 0
        %862 = vmatpush.bf16.msra.mxu0 0
        %863 = vmatpush.bf16.msra.mxu0 0
        %864 = vmatpush.bf16.msra.mxu0 0
        %865 = vmatpush.bf16.msra.mxu0 %v856
        %866 = vmatmul.bf16.gmra.mxu0 %v853
        %v867 = vpop.f32.mrf.mxu0
        %v868 = vadd.f32 0.0, %v867
        %v869 = vpop.f32.mrf.mxu0
        %870 = vdwg.mxu0
        %v872 = vsel %vm732, %v789, 0
        %v875 = vsel %vm772, %v790, 0
        %877 = vmatpush.bf16.msra.mxu0 0
        %878 = vmatpush.bf16.msra.mxu0 0
        %879 = vmatpush.bf16.msra.mxu0 0
        %880 = vmatpush.bf16.msra.mxu0 0
        %881 = vmatpush.bf16.msra.mxu0 0
        %882 = vmatpush.bf16.msra.mxu0 0
        %883 = vmatpush.bf16.msra.mxu0 0
        %884 = vmatpush.bf16.msra.mxu0 %v875
        %885 = vmatmul.bf16.gmra.mxu0 %v872
        %v886 = vpop.f32.mrf.mxu0
        %v887 = vadd.f32 %v868, %v886
        %v888 = vpop.f32.mrf.mxu0
        %889 = vdwg.mxu0
        %890 = vrot.lane.b32.xlu0 %v793, 112
        %v891 = vpop.permute.xlu0 %890
        %892 = vrot.lane.b32.xlu0 %v766, 112
        %v893 = vpop.permute.xlu0 %892
        %v895 = vsel %vm732, %v891, 0
        %v898 = vsel %vm732, %v893, 0
        %900 = vmatpush.bf16.xpose.msra.mxu0 0
        %901 = vmatpush.bf16.xpose.msra.mxu0 0
        %902 = vmatpush.bf16.xpose.msra.mxu0 0
        %903 = vmatpush.bf16.xpose.msra.mxu0 0
        %904 = vmatpush.bf16.xpose.msra.mxu0 0
        %905 = vmatpush.bf16.xpose.msra.mxu0 0
        %906 = vmatpush.bf16.xpose.msra.mxu0 0
        %907 = vmatpush.bf16.xpose.msra.mxu0 %v898
        %908 = vmatmul.bf16.gmra.mxu0 %v895
        %v909 = vpop.f32.mrf.mxu0
        %v910 = vadd.f32 %v730, %v909
        %v911 = vpop.f32.mrf.mxu0
        %912 = vdwg.mxu0
        %v913 = vsel %vm732, %v910, -inf
        %914 = vmax.xlane.f32.xlu0 %v913
        %v915 = vpop.xlane.xlu0 %914
        %v916 = vsub.f32 %v910, %v915
        %v917 = vmul.f32 %v916, 1.442695
        %v918 = vpow.pop %v917
        %v919 = vsel %vm732, %v918, 0.0
        %920 = vadd.xlane.f32.xlu0 %v919
        %v921 = vpop.xlane.xlu0 %920
        %v922 = vrcp.pop %v921
        %v923 = vmul.f32 %v918, %v922
        %v924 = vpack.c.bf16 %v923, %v923
        %925 = vrot.lane.b32.xlu0 %v766, 80
        %v926 = vpop.permute.xlu0 %925
        %v928 = vsel %vm732, %v924, 0
        %v931 = vsel %vm772, %v926, 0
        %933 = vmatpush.bf16.msra.mxu0 0
        %934 = vmatpush.bf16.msra.mxu0 0
        %935 = vmatpush.bf16.msra.mxu0 0
        %936 = vmatpush.bf16.msra.mxu0 0
        %937 = vmatpush.bf16.msra.mxu0 0
        %938 = vmatpush.bf16.msra.mxu0 0
        %939 = vmatpush.bf16.msra.mxu0 0
        %940 = vmatpush.bf16.msra.mxu0 %v931
        %941 = vmatmul.bf16.gmra.mxu0 %v928
        %v942 = vpop.f32.mrf.mxu0
        %v943 = vadd.f32 0.0, %v942
        %v944 = vpop.f32.mrf.mxu0
        %945 = vdwg.mxu0
        %v946 = vpack.c.bf16 %v943, %v943
        %v947 = vld [vmem:[#allocation11 + $0x8] sm:$0xf]
        %v949 = vsel %vm732, %v946, 0
        %v952 = vsel %vm772, %v947, 0
        %954 = vmatpush.bf16.msra.mxu0 0
        %955 = vmatpush.bf16.msra.mxu0 0
        %956 = vmatpush.bf16.msra.mxu0 0
        %957 = vmatpush.bf16.msra.mxu0 0
        %958 = vmatpush.bf16.msra.mxu0 0
        %959 = vmatpush.bf16.msra.mxu0 0
        %960 = vmatpush.bf16.msra.mxu0 0
        %961 = vmatpush.bf16.msra.mxu0 %v952
        %962 = vmatmul.bf16.gmra.mxu0 %v949
        %v963 = vpop.f32.mrf.mxu0
        %v964 = vadd.f32 0.0, %v963
        %v965 = vpop.f32.mrf.mxu0
        %966 = vdwg.mxu0
        %v967 = vadd.f32 %v887, %v964
        %968 = vrot.lane.b32.xlu0 %v793, 104
        %v969 = vpop.permute.xlu0 %968
        %970 = vrot.lane.b32.xlu0 %v766, 104
        %v971 = vpop.permute.xlu0 %970
        %v973 = vsel %vm732, %v969, 0
        %v976 = vsel %vm732, %v971, 0
        %978 = vmatpush.bf16.xpose.msra.mxu0 0
        %979 = vmatpush.bf16.xpose.msra.mxu0 0
        %980 = vmatpush.bf16.xpose.msra.mxu0 0
        %981 = vmatpush.bf16.xpose.msra.mxu0 0
        %982 = vmatpush.bf16.xpose.msra.mxu0 0
        %983 = vmatpush.bf16.xpose.msra.mxu0 0
        %984 = vmatpush.bf16.xpose.msra.mxu0 0
        %985 = vmatpush.bf16.xpose.msra.mxu0 %v976
        %986 = vmatmul.bf16.gmra.mxu0 %v973
        %v987 = vpop.f32.mrf.mxu0
        %v988 = vadd.f32 %v730, %v987
        %v989 = vpop.f32.mrf.mxu0
        %990 = vdwg.mxu0
        %v991 = vsel %vm732, %v988, -inf
        %992 = vmax.xlane.f32.xlu0 %v991
        %v993 = vpop.xlane.xlu0 %992
        %v994 = vsub.f32 %v988, %v993
        %v995 = vmul.f32 %v994, 1.442695
        %v996 = vpow.pop %v995
        %v997 = vsel %vm732, %v996, 0.0
        %998 = vadd.xlane.f32.xlu0 %v997
        %v999 = vpop.xlane.xlu0 %998
        %v1000 = vrcp.pop %v999
        %v1001 = vmul.f32 %v996, %v1000
        %v1002 = vpack.c.bf16 %v1001, %v1001
        %1003 = vrot.lane.b32.xlu0 %v766, 72
        %v1004 = vpop.permute.xlu0 %1003
        %v1006 = vsel %vm732, %v1002, 0
        %v1009 = vsel %vm772, %v1004, 0
        %1011 = vmatpush.bf16.msra.mxu0 0
        %1012 = vmatpush.bf16.msra.mxu0 0
        %1013 = vmatpush.bf16.msra.mxu0 0
        %1014 = vmatpush.bf16.msra.mxu0 0
        %1015 = vmatpush.bf16.msra.mxu0 0
        %1016 = vmatpush.bf16.msra.mxu0 0
        %1017 = vmatpush.bf16.msra.mxu0 0
        %1018 = vmatpush.bf16.msra.mxu0 %v1009
        %1019 = vmatmul.bf16.gmra.mxu0 %v1006
        %v1020 = vpop.f32.mrf.mxu0
        %v1021 = vadd.f32 0.0, %v1020
        %v1022 = vpop.f32.mrf.mxu0
        %1023 = vdwg.mxu0
        %v1024 = vpack.c.bf16 %v1021, %v1021
        %v1025 = vld [vmem:[#allocation11 + $0xc] sm:$0xf]
        %v1027 = vsel %vm732, %v1024, 0
        %v1030 = vsel %vm772, %v1025, 0
        %1032 = vmatpush.bf16.msra.mxu0 0
        %1033 = vmatpush.bf16.msra.mxu0 0
        %1034 = vmatpush.bf16.msra.mxu0 0
        %1035 = vmatpush.bf16.msra.mxu0 0
        %1036 = vmatpush.bf16.msra.mxu0 0
        %1037 = vmatpush.bf16.msra.mxu0 0
        %1038 = vmatpush.bf16.msra.mxu0 0
        %1039 = vmatpush.bf16.msra.mxu0 %v1030
        %1040 = vmatmul.bf16.gmra.mxu0 %v1027
        %v1041 = vpop.f32.mrf.mxu0
        %v1042 = vadd.f32 0.0, %v1041
        %v1043 = vpop.f32.mrf.mxu0
        %1044 = vdwg.mxu0
        %v1045 = vadd.f32 %v967, %v1042
        %v1046 = vld [vmem:[%s10] sm:$0x1]
        %v1048 = vperm.slane %v1046, 0
        %v1050 = vadd.f32 %v1045, %v1048
        %v1051 = vadd.f32 %v547, %v1050
        %v1052 = vpack.c.bf16 %v1051, %v1051
        %vm1053 = vcmask 257024
        %1054 = vst.msk [vmem:[%s541] sm:$0xf] %vm1053, %v1052
        %s1055 = sand.u32 %s303, 1
        %s1056 = scalar_lea.sflag [#allocation4], %s1055
        %s1057 = sand.u32 %s303, 1
        %s1058 = smul.addr %s1057, 4
        %s1059 = scalar_lea.vmem [#allocation13], %s1058
        // Predicated region
        $region89: #{tpu_custom_call.1} parent=63 // pred_check
          %p1060 = pneg %p313
        $region90: #{tpu_custom_call.1} parent=63 // pred_check_branch
          %1062 = sbr.rel (%p1060) target = $region92
        $region91: #{tpu_custom_call.1} parent=63 // pred_region
          %1064 = vsyncadd %s1056, 0
          %s1065 = sadd.s32 %s38, %s37
          %s1066 = smul.addr %s1065, 4
          %s1067 = scalar_lea.hbm %s11, %s1066
          %s1069 = sshll.u32 %s1059, 4
          %s1070 = int_to_ptr.vmem [resolvable:$true] %s1069
          %s1071 = sshll.u32 %s1067, 4
          %s1072 = int_to_ptr.hbm [resolvable:$true] %s1071
          %1074 = dma.vmem_to_hbm [thread:$0]  %s1070, 64, %s1072, %s1056
        $region92: #{tpu_custom_call.1} parent=63 // pred_fallthru
          _
      $region64: #{tpu_custom_call.1} parent=5 // pred_fallthru
        _
      %p1075 = scmp.le.s32.totalorder 2, %s28
      // Predicated region
      $region93: #{tpu_custom_call.1} parent=5 // pred_check
        %p1076 = pneg %p1075
      $region94: #{tpu_custom_call.1} parent=5 // pred_check_branch
        %1078 = sbr.rel (%p1076) target = $region96
      $region95: #{tpu_custom_call.1} parent=5 // pred_region
        %s1079 = ssub.s32 %s28, 2
        // Predicated region
        $region97: #{tpu_custom_call.1} parent=95 // pred_check
          %p1080 = pneg %p319
        $region98: #{tpu_custom_call.1} parent=95 // pred_check_branch
          %1082 = sbr.rel (%p1080) target = $region100
        $region99: #{tpu_custom_call.1} parent=95 // pred_region
          %s1083 = sand.u32 %s304, 1
          %s1084 = scalar_lea.sflag [#allocation4], %s1083
          %s1085 = sand.u32 %s304, 1
          %s1086 = smul.addr %s1085, 4
          %s1087 = scalar_lea.vmem [#allocation13], %s1086
          %1089 = dma.done %s1084, 64
        $region100: #{tpu_custom_call.1} parent=95 // pred_fallthru
          _
      $region96: #{tpu_custom_call.1} parent=5 // pred_fallthru
        _
    $region6: #{tpu_custom_call.1} parent=1 // loop_footer
      %s32 = sadd.s32 1, %s28
    $region7: #{tpu_custom_call.1} parent=1 // loop_footer_branch
      %27 = sbr.rel target = $region3
    $region8: #{tpu_custom_call.1} parent=1 // loop_exit
      _
    %1090 = vsyncpa [#allocation3], 1
    %s1091 = scalar_lea.sflag [#allocation3], 1
    %1092 = vsyncpa %s1091, 1
    %1093 = vsyncpa [#allocation6], 1
    %s1094 = scalar_lea.sflag [#allocation6], 1
    %1095 = vsyncpa %s1094, 1
    %1096 = vsyncpa [#allocation9], 1
    %1097 = vsyncpa [#allocation12], 1
    %1098 = vsyncpa [#allocation4], 1
    %s1099 = scalar_lea.sflag [#allocation4], 1
    %1100 = vsyncpa %s1099, 1

</llo_original>
